<compile_context>
chip_gen: v7x
topology: tpu7x:2x2x1
jax: 0.10.0
libtpu: 0.0.40
codegen_flags: <defaults>
</compile_context>

<pallas_src>
import functools

import jax
import jax.numpy as jnp
from jax import lax
from jax.experimental import pallas as pl
from jax.experimental.pallas import tpu as pltpu

K = 3  # conv kernel size


def _cae_kernel(x_ref, w1_ref, w2_ref, o_ref, *, H, W):
    """Fused conv3x3 + ReLU + (transpose-)conv3x3 for one image.

    x_ref:  (Cin,  H*W)        input image, channels-in-sublane / spatial-in-lane
    w1_ref: (9, Cmid, Cin)     conv1 weight, tap-major (kh*3+kw)
    w2_ref: (9, Cout, Cmid)    conv_transpose weight, flipped + channel-swapped, tap-major
    o_ref:  (Cout, H*W)        output image
    """
    HW = H * W
    S = W + 1  # max |flat shift| of any 3x3 tap

    Cin = x_ref.shape[0]
    Cmid = w1_ref.shape[1]
    Cout = o_ref.shape[0]

    # Column-validity masks (computed once, shape (1, HW)); vertical out-of-range
    # taps are handled by the zero extension of the flat axis below.
    col = lax.broadcasted_iota(jnp.int32, (1, HW), 1) % W
    mask_l = col >= 1          # valid positions when dw = -1 (kw == 0)
    mask_r = col <= W - 2      # valid positions when dw = +1 (kw == 2)

    def conv3x3(a, w_ref, c_in, c_out):
        # a: (c_in, HW) value; w_ref: (9, c_out, c_in) Ref.
        zpad = jnp.zeros((c_in, S), jnp.float32)
        az = jnp.concatenate([zpad, a, zpad], axis=1)        # (c_in, HW + 2S)
        acc = jnp.zeros((c_out, HW), jnp.float32)
        for kh in range(K):
            for kw in range(K):
                s = (kh - 1) * W + (kw - 1)                  # flat shift of this tap
                sl = az[:, S + s: S + s + HW]                # (c_in, HW): a[p + s], 0 if OOB rows
                if kw == 0:
                    sl = jnp.where(mask_l, sl, 0.0)
                elif kw == 2:
                    sl = jnp.where(mask_r, sl, 0.0)
                acc = acc + jnp.dot(w_ref[kh * K + kw], sl,
                                    preferred_element_type=jnp.float32)
        return acc

    x = x_ref[...].astype(jnp.float32)                       # (Cin, HW)
    h = jnp.maximum(conv3x3(x, w1_ref, Cin, Cmid), 0.0)      # (Cmid, HW), ReLU
    y = conv3x3(h, w2_ref, Cmid, Cout)                       # (Cout, HW)
    o_ref[...] = y.astype(o_ref.dtype)


def conv_autoencoder_forward(x_nchw, w1_torch, wt_torch):
    """Forward pass of ConvAutoEncoder.

    x_nchw:   (N, Cin, H, W)      float32, PyTorch NCHW convention
    w1_torch: (Cmid, Cin, 3, 3)   nn.Conv2d weight (OIHW)
    wt_torch: (Cmid, Cout, 3, 3)  nn.ConvTranspose2d weight (IOHW)
    returns:  (N, Cout, H, W)
    """
    N, Cin, H, W = x_nchw.shape
    Cmid = w1_torch.shape[0]
    Cout = wt_torch.shape[1]
    HW = H * W

    # ---- glue: pure reshapes + tap-major weight packing (no transpose/pad of x) ----
    x_flat = x_nchw.reshape(N, Cin, HW).astype(jnp.float32)

    # conv1: OIHW -> (kh,kw,O,I) -> (9, Cmid, Cin)
    w1_packed = jnp.transpose(w1_torch.astype(jnp.float32),
                              (2, 3, 0, 1)).reshape(K * K, Cmid, Cin)
    # conv_transpose (stride=1, pad=1) == correlation with spatially flipped,
    # channel-swapped kernel: IOHW -flip-> (kh,kw,O,I) -> (9, Cout, Cmid)
    w2_packed = jnp.transpose(jnp.flip(wt_torch.astype(jnp.float32), axis=(2, 3)),
                              (2, 3, 1, 0)).reshape(K * K, Cout, Cmid)

    kernel = functools.partial(_cae_kernel, H=H, W=W)

    out_flat = pl.pallas_call(
        kernel,
        out_shape=jax.ShapeDtypeStruct((N, Cout, HW), jnp.float32),
        grid_spec=pltpu.PrefetchScalarGridSpec(
            num_scalar_prefetch=0,
            grid=(N,),
            in_specs=[
                pl.BlockSpec((pl.Squeezed(), Cin, HW), lambda n: (n, 0, 0)),
                pl.BlockSpec((K * K, Cmid, Cin), lambda n: (0, 0, 0)),
                pl.BlockSpec((K * K, Cout, Cmid), lambda n: (0, 0, 0)),
            ],
            out_specs=pl.BlockSpec((pl.Squeezed(), Cout, HW),
                                   lambda n: (n, 0, 0)),
        ),
        compiler_params=pltpu.CompilerParams(
            dimension_semantics=("parallel",)),
    )(x_flat, w1_packed, w2_packed)

    return out_flat.reshape(N, Cout, H, W)


def _reference(x_nchw, w1_torch, wt_torch):
    """Pure-JAX reference (XLA convs) with identical PyTorch semantics."""
    x_nhwc = jnp.transpose(x_nchw, (0, 2, 3, 1))
    w1_hwio = jnp.transpose(w1_torch, (2, 3, 1, 0))
    w2_hwio = jnp.transpose(jnp.flip(wt_torch, axis=(2, 3)), (2, 3, 0, 1))
    dn = ('NHWC', 'HWIO', 'NHWC')
    h = lax.conv_general_dilated(x_nhwc, w1_hwio, (1, 1), 'SAME',
                                 dimension_numbers=dn)
    h = jnp.maximum(h, 0.0)
    y = lax.conv_general_dilated(h, w2_hwio, (1, 1), 'SAME',
                                 dimension_numbers=dn)
    return jnp.transpose(y, (0, 3, 1, 2))


if __name__ == "__main__":
    key = jax.random.PRNGKey(0)
    k_x, k_w1, k_w2 = jax.random.split(key, 3)

    # small shapes consistent with the module: NCHW input, 3 -> 16 -> 3 channels
    N, Cin, H, W = 2, 3, 16, 16
    Cmid, Cout = 16, 3

    x = jax.random.normal(k_x, (N, Cin, H, W), dtype=jnp.float32)

    # deterministic PyTorch-like uniform init: U(-1/sqrt(fan_in), 1/sqrt(fan_in))
    b1 = 1.0 / (Cin * K * K) ** 0.5
    w1 = jax.random.uniform(k_w1, (Cmid, Cin, K, K), jnp.float32, -b1, b1)
    b2 = 1.0 / (Cout * K * K) ** 0.5
    wt = jax.random.uniform(k_w2, (Cmid, Cout, K, K), jnp.float32, -b2, b2)

    y = conv_autoencoder_forward(x, w1, wt)
    y = jax.block_until_ready(y)

    y_ref = _reference(x, w1, wt)
    assert y.shape == (N, Cout, H, W)
    assert jnp.allclose(y, y_ref, atol=1e-4, rtol=1e-4), \
        float(jnp.max(jnp.abs(y - y_ref)))

    print("KERNEL_OK")
</pallas_src>

<mosaic_0001>
module attributes {stable_mosaic.version = 11 : i64} {
  func.func @_cae_kernel(%arg0: i32, %arg1: memref<1x3x256xf32, #tpu.memory_space<vmem>>, %arg2: memref<9x16x3xf32, #tpu.memory_space<vmem>>, %arg3: memref<9x3x16xf32, #tpu.memory_space<vmem>>, %arg4: memref<1x3x256xf32, #tpu.memory_space<vmem>>) attributes {dimension_semantics = [#tpu.dimension_semantics<parallel>], iteration_bounds = array<i64: 2>, scalar_prefetch = 0 : i64, scratch_operands = 0 : i64, tpu.core_type = #tpu.core_type<tc>, window_params = [{transform_indices = @transform_0, window_bounds = array<i64: 1, 3, 256>}, {pipeline_mode = #tpu.pipeline_mode<synchronous>, transform_indices = @transform_1, window_bounds = array<i64: 9, 16, 3>}, {pipeline_mode = #tpu.pipeline_mode<synchronous>, transform_indices = @transform_2, window_bounds = array<i64: 9, 3, 16>}, {transform_indices = @transform_3, window_bounds = array<i64: 1, 3, 256>}]} {
    %0 = tpu.iota {dimensions = array<i32: 1>} : vector<1x256xi32>
    %c16_i32 = arith.constant 16 : i32
    %c0_i32 = arith.constant 0 : i32
    %1 = arith.cmpi eq, %c16_i32, %c0_i32 : i32
    %c1_i32 = arith.constant 1 : i32
    %2 = arith.select %1, %c1_i32, %c16_i32 : i32
    %3 = vector.broadcast %2 : i32 to vector<1x256xi32>
    %4 = arith.remsi %0, %3 : vector<1x256xi32>
    %c0_i32_0 = arith.constant 0 : i32
    %5 = vector.broadcast %c0_i32_0 : i32 to vector<1x256xi32>
    %6 = arith.cmpi ne, %4, %5 : vector<1x256xi32>
    %c0_i32_1 = arith.constant 0 : i32
    %7 = vector.broadcast %c0_i32_1 : i32 to vector<1x256xi32>
    %8 = arith.cmpi slt, %4, %7 : vector<1x256xi32>
    %c0_i32_2 = arith.constant 0 : i32
    %9 = arith.cmpi slt, %2, %c0_i32_2 : i32
    %10 = vector.broadcast %9 : i1 to vector<1x256xi1>
    %11 = vector.broadcast %10 : vector<1x256xi1> to vector<1x256xi1>
    %12 = arith.xori %8, %11 : vector<1x256xi1>
    %13 = arith.andi %12, %6 : vector<1x256xi1>
    %14 = vector.broadcast %2 : i32 to vector<1x256xi32>
    %15 = arith.addi %4, %14 : vector<1x256xi32>
    %16 = arith.select %13, %15, %4 : vector<1x256xi1>, vector<1x256xi32>
    %c1_i32_3 = arith.constant 1 : i32
    %17 = vector.broadcast %c1_i32_3 : i32 to vector<1x256xi32>
    %18 = arith.cmpi sge, %16, %17 : vector<1x256xi32>
    %c14_i32 = arith.constant 14 : i32
    %19 = vector.broadcast %c14_i32 : i32 to vector<1x256xi32>
    %20 = arith.cmpi sle, %16, %19 : vector<1x256xi32>
    %c0 = arith.constant 0 : index
    %c0_4 = arith.constant 0 : index
    %c0_5 = arith.constant 0 : index
    %21 = vector.load %arg1[%c0, %c0_4, %c0_5] : memref<1x3x256xf32, #tpu.memory_space<vmem>>, vector<1x3x256xf32>
    %22 = vector.shape_cast %21 : vector<1x3x256xf32> to vector<3x256xf32>
    %cst = arith.constant 0.000000e+00 : f32
    %23 = vector.broadcast %cst : f32 to vector<3x17xf32>
    %24 = tpu.concatenate %23, %22, %23 in 1 : vector<3x17xf32>, vector<3x256xf32>, vector<3x17xf32> -> vector<3x290xf32>
    %cst_6 = arith.constant 0.000000e+00 : f32
    %25 = vector.broadcast %cst_6 : f32 to vector<16x256xf32>
    %26 = vector.extract_strided_slice %24 {offsets = [0, 0], sizes = [3, 256], strides = [1, 1]} : vector<3x290xf32> to vector<3x256xf32>
    %cst_7 = arith.constant 0.000000e+00 : f32
    %27 = vector.shape_cast %18 : vector<1x256xi1> to vector<1x256xi1>
    %28 = vector.broadcast %27 : vector<1x256xi1> to vector<3x256xi1>
    %29 = vector.broadcast %cst_7 : f32 to vector<3x256xf32>
    %30 = arith.select %28, %26, %29 : vector<3x256xi1>, vector<3x256xf32>
    %c0_8 = arith.constant 0 : index
    %c0_9 = arith.constant 0 : index
    %c0_10 = arith.constant 0 : index
    %31 = vector.load %arg2[%c0_8, %c0_9, %c0_10] : memref<9x16x3xf32, #tpu.memory_space<vmem>>, vector<1x16x3xf32>
    %32 = vector.shape_cast %31 : vector<1x16x3xf32> to vector<16x3xf32>
    %cst_11 = arith.constant dense<0.000000e+00> : vector<16x256xf32>
    %33 = tpu.matmul %32, %30, %cst_11 {dimension_numbers = #tpu.dot_dimension_numbers<[1], [0], [0], [1], [0, 0, 1, 1], [], []>} : vector<16x3xf32>, vector<3x256xf32>, vector<16x256xf32> -> vector<16x256xf32>
    %34 = arith.addf %25, %33 : vector<16x256xf32>
    %35 = vector.extract_strided_slice %24 {offsets = [0, 1], sizes = [3, 256], strides = [1, 1]} : vector<3x290xf32> to vector<3x256xf32>
    %c1 = arith.constant 1 : index
    %c0_12 = arith.constant 0 : index
    %c0_13 = arith.constant 0 : index
    %36 = vector.load %arg2[%c1, %c0_12, %c0_13] : memref<9x16x3xf32, #tpu.memory_space<vmem>>, vector<1x16x3xf32>
    %37 = vector.shape_cast %36 : vector<1x16x3xf32> to vector<16x3xf32>
    %cst_14 = arith.constant dense<0.000000e+00> : vector<16x256xf32>
    %38 = tpu.matmul %37, %35, %cst_14 {dimension_numbers = #tpu.dot_dimension_numbers<[1], [0], [0], [1], [0, 0, 1, 1], [], []>} : vector<16x3xf32>, vector<3x256xf32>, vector<16x256xf32> -> vector<16x256xf32>
    %39 = arith.addf %34, %38 : vector<16x256xf32>
    %40 = vector.extract_strided_slice %24 {offsets = [0, 2], sizes = [3, 256], strides = [1, 1]} : vector<3x290xf32> to vector<3x256xf32>
    %cst_15 = arith.constant 0.000000e+00 : f32
    %41 = vector.shape_cast %20 : vector<1x256xi1> to vector<1x256xi1>
    %42 = vector.broadcast %41 : vector<1x256xi1> to vector<3x256xi1>
    %43 = vector.broadcast %cst_15 : f32 to vector<3x256xf32>
    %44 = arith.select %42, %40, %43 : vector<3x256xi1>, vector<3x256xf32>
    %c2 = arith.constant 2 : index
    %c0_16 = arith.constant 0 : index
    %c0_17 = arith.constant 0 : index
    %45 = vector.load %arg2[%c2, %c0_16, %c0_17] : memref<9x16x3xf32, #tpu.memory_space<vmem>>, vector<1x16x3xf32>
    %46 = vector.shape_cast %45 : vector<1x16x3xf32> to vector<16x3xf32>
    %cst_18 = arith.constant dense<0.000000e+00> : vector<16x256xf32>
    %47 = tpu.matmul %46, %44, %cst_18 {dimension_numbers = #tpu.dot_dimension_numbers<[1], [0], [0], [1], [0, 0, 1, 1], [], []>} : vector<16x3xf32>, vector<3x256xf32>, vector<16x256xf32> -> vector<16x256xf32>
    %48 = arith.addf %39, %47 : vector<16x256xf32>
    %49 = vector.extract_strided_slice %24 {offsets = [0, 16], sizes = [3, 256], strides = [1, 1]} : vector<3x290xf32> to vector<3x256xf32>
    %cst_19 = arith.constant 0.000000e+00 : f32
    %50 = vector.shape_cast %18 : vector<1x256xi1> to vector<1x256xi1>
    %51 = vector.broadcast %50 : vector<1x256xi1> to vector<3x256xi1>
    %52 = vector.broadcast %cst_19 : f32 to vector<3x256xf32>
    %53 = arith.select %51, %49, %52 : vector<3x256xi1>, vector<3x256xf32>
    %c3 = arith.constant 3 : index
    %c0_20 = arith.constant 0 : index
    %c0_21 = arith.constant 0 : index
    %54 = vector.load %arg2[%c3, %c0_20, %c0_21] : memref<9x16x3xf32, #tpu.memory_space<vmem>>, vector<1x16x3xf32>
    %55 = vector.shape_cast %54 : vector<1x16x3xf32> to vector<16x3xf32>
    %cst_22 = arith.constant dense<0.000000e+00> : vector<16x256xf32>
    %56 = tpu.matmul %55, %53, %cst_22 {dimension_numbers = #tpu.dot_dimension_numbers<[1], [0], [0], [1], [0, 0, 1, 1], [], []>} : vector<16x3xf32>, vector<3x256xf32>, vector<16x256xf32> -> vector<16x256xf32>
    %57 = arith.addf %48, %56 : vector<16x256xf32>
    %58 = vector.extract_strided_slice %24 {offsets = [0, 17], sizes = [3, 256], strides = [1, 1]} : vector<3x290xf32> to vector<3x256xf32>
    %c4 = arith.constant 4 : index
    %c0_23 = arith.constant 0 : index
    %c0_24 = arith.constant 0 : index
    %59 = vector.load %arg2[%c4, %c0_23, %c0_24] : memref<9x16x3xf32, #tpu.memory_space<vmem>>, vector<1x16x3xf32>
    %60 = vector.shape_cast %59 : vector<1x16x3xf32> to vector<16x3xf32>
    %cst_25 = arith.constant dense<0.000000e+00> : vector<16x256xf32>
    %61 = tpu.matmul %60, %58, %cst_25 {dimension_numbers = #tpu.dot_dimension_numbers<[1], [0], [0], [1], [0, 0, 1, 1], [], []>} : vector<16x3xf32>, vector<3x256xf32>, vector<16x256xf32> -> vector<16x256xf32>
    %62 = arith.addf %57, %61 : vector<16x256xf32>
    %63 = vector.extract_strided_slice %24 {offsets = [0, 18], sizes = [3, 256], strides = [1, 1]} : vector<3x290xf32> to vector<3x256xf32>
    %cst_26 = arith.constant 0.000000e+00 : f32
    %64 = vector.shape_cast %20 : vector<1x256xi1> to vector<1x256xi1>
    %65 = vector.broadcast %64 : vector<1x256xi1> to vector<3x256xi1>
    %66 = vector.broadcast %cst_26 : f32 to vector<3x256xf32>
    %67 = arith.select %65, %63, %66 : vector<3x256xi1>, vector<3x256xf32>
    %c5 = arith.constant 5 : index
    %c0_27 = arith.constant 0 : index
    %c0_28 = arith.constant 0 : index
    %68 = vector.load %arg2[%c5, %c0_27, %c0_28] : memref<9x16x3xf32, #tpu.memory_space<vmem>>, vector<1x16x3xf32>
    %69 = vector.shape_cast %68 : vector<1x16x3xf32> to vector<16x3xf32>
    %cst_29 = arith.constant dense<0.000000e+00> : vector<16x256xf32>
    %70 = tpu.matmul %69, %67, %cst_29 {dimension_numbers = #tpu.dot_dimension_numbers<[1], [0], [0], [1], [0, 0, 1, 1], [], []>} : vector<16x3xf32>, vector<3x256xf32>, vector<16x256xf32> -> vector<16x256xf32>
    %71 = arith.addf %62, %70 : vector<16x256xf32>
    %72 = vector.extract_strided_slice %24 {offsets = [0, 32], sizes = [3, 256], strides = [1, 1]} : vector<3x290xf32> to vector<3x256xf32>
    %cst_30 = arith.constant 0.000000e+00 : f32
    %73 = vector.shape_cast %18 : vector<1x256xi1> to vector<1x256xi1>
    %74 = vector.broadcast %73 : vector<1x256xi1> to vector<3x256xi1>
    %75 = vector.broadcast %cst_30 : f32 to vector<3x256xf32>
    %76 = arith.select %74, %72, %75 : vector<3x256xi1>, vector<3x256xf32>
    %c6 = arith.constant 6 : index
    %c0_31 = arith.constant 0 : index
    %c0_32 = arith.constant 0 : index
    %77 = vector.load %arg2[%c6, %c0_31, %c0_32] : memref<9x16x3xf32, #tpu.memory_space<vmem>>, vector<1x16x3xf32>
    %78 = vector.shape_cast %77 : vector<1x16x3xf32> to vector<16x3xf32>
    %cst_33 = arith.constant dense<0.000000e+00> : vector<16x256xf32>
    %79 = tpu.matmul %78, %76, %cst_33 {dimension_numbers = #tpu.dot_dimension_numbers<[1], [0], [0], [1], [0, 0, 1, 1], [], []>} : vector<16x3xf32>, vector<3x256xf32>, vector<16x256xf32> -> vector<16x256xf32>
    %80 = arith.addf %71, %79 : vector<16x256xf32>
    %81 = vector.extract_strided_slice %24 {offsets = [0, 33], sizes = [3, 256], strides = [1, 1]} : vector<3x290xf32> to vector<3x256xf32>
    %c7 = arith.constant 7 : index
    %c0_34 = arith.constant 0 : index
    %c0_35 = arith.constant 0 : index
    %82 = vector.load %arg2[%c7, %c0_34, %c0_35] : memref<9x16x3xf32, #tpu.memory_space<vmem>>, vector<1x16x3xf32>
    %83 = vector.shape_cast %82 : vector<1x16x3xf32> to vector<16x3xf32>
    %cst_36 = arith.constant dense<0.000000e+00> : vector<16x256xf32>
    %84 = tpu.matmul %83, %81, %cst_36 {dimension_numbers = #tpu.dot_dimension_numbers<[1], [0], [0], [1], [0, 0, 1, 1], [], []>} : vector<16x3xf32>, vector<3x256xf32>, vector<16x256xf32> -> vector<16x256xf32>
    %85 = arith.addf %80, %84 : vector<16x256xf32>
    %86 = vector.extract_strided_slice %24 {offsets = [0, 34], sizes = [3, 256], strides = [1, 1]} : vector<3x290xf32> to vector<3x256xf32>
    %cst_37 = arith.constant 0.000000e+00 : f32
    %87 = vector.shape_cast %20 : vector<1x256xi1> to vector<1x256xi1>
    %88 = vector.broadcast %87 : vector<1x256xi1> to vector<3x256xi1>
    %89 = vector.broadcast %cst_37 : f32 to vector<3x256xf32>
    %90 = arith.select %88, %86, %89 : vector<3x256xi1>, vector<3x256xf32>
    %c8 = arith.constant 8 : index
    %c0_38 = arith.constant 0 : index
    %c0_39 = arith.constant 0 : index
    %91 = vector.load %arg2[%c8, %c0_38, %c0_39] : memref<9x16x3xf32, #tpu.memory_space<vmem>>, vector<1x16x3xf32>
    %92 = vector.shape_cast %91 : vector<1x16x3xf32> to vector<16x3xf32>
    %cst_40 = arith.constant dense<0.000000e+00> : vector<16x256xf32>
    %93 = tpu.matmul %92, %90, %cst_40 {dimension_numbers = #tpu.dot_dimension_numbers<[1], [0], [0], [1], [0, 0, 1, 1], [], []>} : vector<16x3xf32>, vector<3x256xf32>, vector<16x256xf32> -> vector<16x256xf32>
    %94 = arith.addf %85, %93 : vector<16x256xf32>
    %cst_41 = arith.constant 0.000000e+00 : f32
    %95 = vector.broadcast %cst_41 : f32 to vector<16x256xf32>
    %96 = arith.maximumf %94, %95 : vector<16x256xf32>
    %cst_42 = arith.constant 0.000000e+00 : f32
    %97 = vector.broadcast %cst_42 : f32 to vector<16x17xf32>
    %98 = tpu.concatenate %97, %96, %97 in 1 : vector<16x17xf32>, vector<16x256xf32>, vector<16x17xf32> -> vector<16x290xf32>
    %cst_43 = arith.constant 0.000000e+00 : f32
    %99 = vector.broadcast %cst_43 : f32 to vector<3x256xf32>
    %100 = vector.extract_strided_slice %98 {offsets = [0, 0], sizes = [16, 256], strides = [1, 1]} : vector<16x290xf32> to vector<16x256xf32>
    %cst_44 = arith.constant 0.000000e+00 : f32
    %101 = vector.shape_cast %18 : vector<1x256xi1> to vector<1x256xi1>
    %102 = vector.broadcast %101 : vector<1x256xi1> to vector<16x256xi1>
    %103 = vector.broadcast %cst_44 : f32 to vector<16x256xf32>
    %104 = arith.select %102, %100, %103 : vector<16x256xi1>, vector<16x256xf32>
    %c0_45 = arith.constant 0 : index
    %c0_46 = arith.constant 0 : index
    %c0_47 = arith.constant 0 : index
    %105 = vector.load %arg3[%c0_45, %c0_46, %c0_47] : memref<9x3x16xf32, #tpu.memory_space<vmem>>, vector<1x3x16xf32>
    %106 = vector.shape_cast %105 : vector<1x3x16xf32> to vector<3x16xf32>
    %cst_48 = arith.constant dense<0.000000e+00> : vector<3x256xf32>
    %107 = tpu.matmul %106, %104, %cst_48 {dimension_numbers = #tpu.dot_dimension_numbers<[1], [0], [0], [1], [0, 0, 1, 1], [], []>} : vector<3x16xf32>, vector<16x256xf32>, vector<3x256xf32> -> vector<3x256xf32>
    %108 = arith.addf %99, %107 : vector<3x256xf32>
    %109 = vector.extract_strided_slice %98 {offsets = [0, 1], sizes = [16, 256], strides = [1, 1]} : vector<16x290xf32> to vector<16x256xf32>
    %c1_49 = arith.constant 1 : index
    %c0_50 = arith.constant 0 : index
    %c0_51 = arith.constant 0 : index
    %110 = vector.load %arg3[%c1_49, %c0_50, %c0_51] : memref<9x3x16xf32, #tpu.memory_space<vmem>>, vector<1x3x16xf32>
    %111 = vector.shape_cast %110 : vector<1x3x16xf32> to vector<3x16xf32>
    %cst_52 = arith.constant dense<0.000000e+00> : vector<3x256xf32>
    %112 = tpu.matmul %111, %109, %cst_52 {dimension_numbers = #tpu.dot_dimension_numbers<[1], [0], [0], [1], [0, 0, 1, 1], [], []>} : vector<3x16xf32>, vector<16x256xf32>, vector<3x256xf32> -> vector<3x256xf32>
    %113 = arith.addf %108, %112 : vector<3x256xf32>
    %114 = vector.extract_strided_slice %98 {offsets = [0, 2], sizes = [16, 256], strides = [1, 1]} : vector<16x290xf32> to vector<16x256xf32>
    %cst_53 = arith.constant 0.000000e+00 : f32
    %115 = vector.shape_cast %20 : vector<1x256xi1> to vector<1x256xi1>
    %116 = vector.broadcast %115 : vector<1x256xi1> to vector<16x256xi1>
    %117 = vector.broadcast %cst_53 : f32 to vector<16x256xf32>
    %118 = arith.select %116, %114, %117 : vector<16x256xi1>, vector<16x256xf32>
    %c2_54 = arith.constant 2 : index
    %c0_55 = arith.constant 0 : index
    %c0_56 = arith.constant 0 : index
    %119 = vector.load %arg3[%c2_54, %c0_55, %c0_56] : memref<9x3x16xf32, #tpu.memory_space<vmem>>, vector<1x3x16xf32>
    %120 = vector.shape_cast %119 : vector<1x3x16xf32> to vector<3x16xf32>
    %cst_57 = arith.constant dense<0.000000e+00> : vector<3x256xf32>
    %121 = tpu.matmul %120, %118, %cst_57 {dimension_numbers = #tpu.dot_dimension_numbers<[1], [0], [0], [1], [0, 0, 1, 1], [], []>} : vector<3x16xf32>, vector<16x256xf32>, vector<3x256xf32> -> vector<3x256xf32>
    %122 = arith.addf %113, %121 : vector<3x256xf32>
    %123 = vector.extract_strided_slice %98 {offsets = [0, 16], sizes = [16, 256], strides = [1, 1]} : vector<16x290xf32> to vector<16x256xf32>
    %cst_58 = arith.constant 0.000000e+00 : f32
    %124 = vector.shape_cast %18 : vector<1x256xi1> to vector<1x256xi1>
    %125 = vector.broadcast %124 : vector<1x256xi1> to vector<16x256xi1>
    %126 = vector.broadcast %cst_58 : f32 to vector<16x256xf32>
    %127 = arith.select %125, %123, %126 : vector<16x256xi1>, vector<16x256xf32>
    %c3_59 = arith.constant 3 : index
    %c0_60 = arith.constant 0 : index
    %c0_61 = arith.constant 0 : index
    %128 = vector.load %arg3[%c3_59, %c0_60, %c0_61] : memref<9x3x16xf32, #tpu.memory_space<vmem>>, vector<1x3x16xf32>
    %129 = vector.shape_cast %128 : vector<1x3x16xf32> to vector<3x16xf32>
    %cst_62 = arith.constant dense<0.000000e+00> : vector<3x256xf32>
    %130 = tpu.matmul %129, %127, %cst_62 {dimension_numbers = #tpu.dot_dimension_numbers<[1], [0], [0], [1], [0, 0, 1, 1], [], []>} : vector<3x16xf32>, vector<16x256xf32>, vector<3x256xf32> -> vector<3x256xf32>
    %131 = arith.addf %122, %130 : vector<3x256xf32>
    %132 = vector.extract_strided_slice %98 {offsets = [0, 17], sizes = [16, 256], strides = [1, 1]} : vector<16x290xf32> to vector<16x256xf32>
    %c4_63 = arith.constant 4 : index
    %c0_64 = arith.constant 0 : index
    %c0_65 = arith.constant 0 : index
    %133 = vector.load %arg3[%c4_63, %c0_64, %c0_65] : memref<9x3x16xf32, #tpu.memory_space<vmem>>, vector<1x3x16xf32>
    %134 = vector.shape_cast %133 : vector<1x3x16xf32> to vector<3x16xf32>
    %cst_66 = arith.constant dense<0.000000e+00> : vector<3x256xf32>
    %135 = tpu.matmul %134, %132, %cst_66 {dimension_numbers = #tpu.dot_dimension_numbers<[1], [0], [0], [1], [0, 0, 1, 1], [], []>} : vector<3x16xf32>, vector<16x256xf32>, vector<3x256xf32> -> vector<3x256xf32>
    %136 = arith.addf %131, %135 : vector<3x256xf32>
    %137 = vector.extract_strided_slice %98 {offsets = [0, 18], sizes = [16, 256], strides = [1, 1]} : vector<16x290xf32> to vector<16x256xf32>
    %cst_67 = arith.constant 0.000000e+00 : f32
    %138 = vector.shape_cast %20 : vector<1x256xi1> to vector<1x256xi1>
    %139 = vector.broadcast %138 : vector<1x256xi1> to vector<16x256xi1>
    %140 = vector.broadcast %cst_67 : f32 to vector<16x256xf32>
    %141 = arith.select %139, %137, %140 : vector<16x256xi1>, vector<16x256xf32>
    %c5_68 = arith.constant 5 : index
    %c0_69 = arith.constant 0 : index
    %c0_70 = arith.constant 0 : index
    %142 = vector.load %arg3[%c5_68, %c0_69, %c0_70] : memref<9x3x16xf32, #tpu.memory_space<vmem>>, vector<1x3x16xf32>
    %143 = vector.shape_cast %142 : vector<1x3x16xf32> to vector<3x16xf32>
    %cst_71 = arith.constant dense<0.000000e+00> : vector<3x256xf32>
    %144 = tpu.matmul %143, %141, %cst_71 {dimension_numbers = #tpu.dot_dimension_numbers<[1], [0], [0], [1], [0, 0, 1, 1], [], []>} : vector<3x16xf32>, vector<16x256xf32>, vector<3x256xf32> -> vector<3x256xf32>
    %145 = arith.addf %136, %144 : vector<3x256xf32>
    %146 = vector.extract_strided_slice %98 {offsets = [0, 32], sizes = [16, 256], strides = [1, 1]} : vector<16x290xf32> to vector<16x256xf32>
    %cst_72 = arith.constant 0.000000e+00 : f32
    %147 = vector.shape_cast %18 : vector<1x256xi1> to vector<1x256xi1>
    %148 = vector.broadcast %147 : vector<1x256xi1> to vector<16x256xi1>
    %149 = vector.broadcast %cst_72 : f32 to vector<16x256xf32>
    %150 = arith.select %148, %146, %149 : vector<16x256xi1>, vector<16x256xf32>
    %c6_73 = arith.constant 6 : index
    %c0_74 = arith.constant 0 : index
    %c0_75 = arith.constant 0 : index
    %151 = vector.load %arg3[%c6_73, %c0_74, %c0_75] : memref<9x3x16xf32, #tpu.memory_space<vmem>>, vector<1x3x16xf32>
    %152 = vector.shape_cast %151 : vector<1x3x16xf32> to vector<3x16xf32>
    %cst_76 = arith.constant dense<0.000000e+00> : vector<3x256xf32>
    %153 = tpu.matmul %152, %150, %cst_76 {dimension_numbers = #tpu.dot_dimension_numbers<[1], [0], [0], [1], [0, 0, 1, 1], [], []>} : vector<3x16xf32>, vector<16x256xf32>, vector<3x256xf32> -> vector<3x256xf32>
    %154 = arith.addf %145, %153 : vector<3x256xf32>
    %155 = vector.extract_strided_slice %98 {offsets = [0, 33], sizes = [16, 256], strides = [1, 1]} : vector<16x290xf32> to vector<16x256xf32>
    %c7_77 = arith.constant 7 : index
    %c0_78 = arith.constant 0 : index
    %c0_79 = arith.constant 0 : index
    %156 = vector.load %arg3[%c7_77, %c0_78, %c0_79] : memref<9x3x16xf32, #tpu.memory_space<vmem>>, vector<1x3x16xf32>
    %157 = vector.shape_cast %156 : vector<1x3x16xf32> to vector<3x16xf32>
    %cst_80 = arith.constant dense<0.000000e+00> : vector<3x256xf32>
    %158 = tpu.matmul %157, %155, %cst_80 {dimension_numbers = #tpu.dot_dimension_numbers<[1], [0], [0], [1], [0, 0, 1, 1], [], []>} : vector<3x16xf32>, vector<16x256xf32>, vector<3x256xf32> -> vector<3x256xf32>
    %159 = arith.addf %154, %158 : vector<3x256xf32>
    %160 = vector.extract_strided_slice %98 {offsets = [0, 34], sizes = [16, 256], strides = [1, 1]} : vector<16x290xf32> to vector<16x256xf32>
    %cst_81 = arith.constant 0.000000e+00 : f32
    %161 = vector.shape_cast %20 : vector<1x256xi1> to vector<1x256xi1>
    %162 = vector.broadcast %161 : vector<1x256xi1> to vector<16x256xi1>
    %163 = vector.broadcast %cst_81 : f32 to vector<16x256xf32>
    %164 = arith.select %162, %160, %163 : vector<16x256xi1>, vector<16x256xf32>
    %c8_82 = arith.constant 8 : index
    %c0_83 = arith.constant 0 : index
    %c0_84 = arith.constant 0 : index
    %165 = vector.load %arg3[%c8_82, %c0_83, %c0_84] : memref<9x3x16xf32, #tpu.memory_space<vmem>>, vector<1x3x16xf32>
    %166 = vector.shape_cast %165 : vector<1x3x16xf32> to vector<3x16xf32>
    %cst_85 = arith.constant dense<0.000000e+00> : vector<3x256xf32>
    %167 = tpu.matmul %166, %164, %cst_85 {dimension_numbers = #tpu.dot_dimension_numbers<[1], [0], [0], [1], [0, 0, 1, 1], [], []>} : vector<3x16xf32>, vector<16x256xf32>, vector<3x256xf32> -> vector<3x256xf32>
    %168 = arith.addf %159, %167 : vector<3x256xf32>
    %c0_86 = arith.constant 0 : index
    %c0_87 = arith.constant 0 : index
    %c0_88 = arith.constant 0 : index
    %169 = vector.load %arg4[%c0_86, %c0_87, %c0_88] : memref<1x3x256xf32, #tpu.memory_space<vmem>>, vector<1x3x256xf32>
    %170 = vector.shape_cast %169 : vector<1x3x256xf32> to vector<3x256xf32>
    %171 = vector.shape_cast %168 : vector<3x256xf32> to vector<1x3x256xf32>
    tpu.vector_store %arg4[%c0_86, %c0_87, %c0_88], %171 {strides = array<i32>} : memref<1x3x256xf32, #tpu.memory_space<vmem>>, vector<1x3x256xf32>,
    return
  }
  func.func @transform_0(%arg0: i32) -> (i32, i32, i32) {
    %c0_i32 = arith.constant 0 : i32
    %c0_i32_0 = arith.constant 0 : i32
    %c0_i32_1 = arith.constant 0 : i32
    return %arg0, %c0_i32, %c0_i32_0 : i32, i32, i32
  }
  func.func @transform_1(%arg0: i32) -> (i32, i32, i32) {
    %c0_i32 = arith.constant 0 : i32
    %c0_i32_0 = arith.constant 0 : i32
    %c0_i32_1 = arith.constant 0 : i32
    %c0_i32_2 = arith.constant 0 : i32
    return %c0_i32, %c0_i32_0, %c0_i32_1 : i32, i32, i32
  }
  func.func @transform_2(%arg0: i32) -> (i32, i32, i32) {
    %c0_i32 = arith.constant 0 : i32
    %c0_i32_0 = arith.constant 0 : i32
    %c0_i32_1 = arith.constant 0 : i32
    %c0_i32_2 = arith.constant 0 : i32
    return %c0_i32, %c0_i32_0, %c0_i32_1 : i32, i32, i32
  }
  func.func @transform_3(%arg0: i32) -> (i32, i32, i32) {
    %c0_i32 = arith.constant 0 : i32
    %c0_i32_0 = arith.constant 0 : i32
    %c0_i32_1 = arith.constant 0 : i32
    return %arg0, %c0_i32, %c0_i32_0 : i32, i32, i32
  }
}

</mosaic_0001>

<llo_original>
// kernel: tpu_custom_call.1
$region0: #{tpu_custom_call.1}
  #allocation0 [shape = 'u32[]', space=smem, size = 0x4, offset = 0x4, fixed_abs, tag = 'smem constant byte address 0x4 - core index']
  #allocation1 [shape = 'u32[144,128]{1,0:T(1,128)}', space=vmem, size = 0x12000, scoped, tag = 'internal scratch']
  %s0 = inlined_call_operand.vmem [shape: f32[2,3,256], index: 0, kind: input, shape index: {}]
  %s1 = inlined_call_operand.vmem [shape: f32[9,16,3], index: 1, kind: input, shape index: {}]
  %s2 = inlined_call_operand.vmem [shape: f32[9,3,16], index: 2, kind: input, shape index: {}]
  %s3 = inlined_call_operand.vmem [shape: f32[2,3,256], index: 3, kind: output, shape index: {}]
  %s4 = sld [smem:[#allocation0]]
  $region45: #{tpu_custom_call.1} parent=0
    _
  %s6 = ssub.s32 1, %s4
  %s7 = scalar_select 0, %s6, %s4
  loop: start=0, step=1, limit=4
  $region2: #{tpu_custom_call.1} parent=0 // loop_pre_header
    _
  $region3: #{tpu_custom_call.1} parent=0 // loop_header
    %s9 = sphi 0, %s13
    %p10 = scmp.ge.s32.totalorder %s9, 4
    %s19 = sphi 0, %s21
    %s22 = sphi 0, %s19
    %s23 = sphi 0, %s22
    %s39 = sphi 0, %s23
    %s43 = sphi 0, %s43
    %s45 = sphi 0, %s43
    %s46 = sphi 0, %s45
    %s60 = sphi 0, %s46
    %s64 = sphi 0, %s64
    %s66 = sphi 0, %s64
    %s67 = sphi 0, %s66
    %s81 = sphi 0, %s67
    %s87 = sphi 0, %s89
    %s90 = sphi 0, %s87
    %s91 = sphi 0, %s90
    %s107 = sphi 0, %s91
  $region4: #{tpu_custom_call.1} parent=0 // loop_header_branch
    %12 = sbr.rel (%p10) target = $region8
  $region5: #{tpu_custom_call.1} parent=0 // loop_body
    %s14 = ssub.s32 %s9, 1
    %s15 = ssub.s32 %s9, 2
    %s16 = sadd.s32 %s9, 1
    %s17 = ssub.s32 %s9, %s16
    %p18 = scmp.eq.s32.totalorder %s17, 0
    %s20 = sadd.s32 %s19, 1
    %s21 = scalar_select %p18, %s19, %s20
    %p24 = pneg %p18
    %p25 = scmp.eq.s32.totalorder %s9, 1
    %p26 = por %p24, %p25
    %p27 = scmp.ne.s32.totalorder %s19, %s22
    %p28 = scmp.eq.s32.totalorder %s9, 0
    %p29 = por %p27, %p28
    %p30 = scmp.ne.s32.totalorder %s19, %s22
    %p31 = scmp.eq.s32.totalorder %s14, 1
    %p32 = por %p30, %p31
    %p33 = scmp.ne.s32.totalorder %s22, %s23
    %p34 = scmp.eq.s32.totalorder %s14, 0
    %p35 = por %p33, %p34
    %p36 = scmp.ne.s32.totalorder %s22, %s23
    %p37 = scmp.eq.s32.totalorder %s15, 1
    %p38 = por %p36, %p37
    %p40 = scmp.ne.s32.totalorder %s23, %s39
    %p41 = scmp.eq.s32.totalorder %s15, 0
    %p42 = por %p40, %p41
    %s44 = sadd.s32 %s43, 1
    %p47 = scmp.eq.s32.totalorder %s9, 1
    %p48 = scmp.ne.s32.totalorder %s43, %s45
    %p49 = scmp.eq.s32.totalorder %s9, 0
    %p50 = por %p48, %p49
    %p51 = scmp.ne.s32.totalorder %s43, %s45
    %p52 = scmp.eq.s32.totalorder %s14, 1
    %p53 = por %p51, %p52
    %p54 = scmp.ne.s32.totalorder %s45, %s46
    %p55 = scmp.eq.s32.totalorder %s14, 0
    %p56 = por %p54, %p55
    %p57 = scmp.ne.s32.totalorder %s45, %s46
    %p58 = scmp.eq.s32.totalorder %s15, 1
    %p59 = por %p57, %p58
    %p61 = scmp.ne.s32.totalorder %s46, %s60
    %p62 = scmp.eq.s32.totalorder %s15, 0
    %p63 = por %p61, %p62
    %s65 = sadd.s32 %s64, 1
    %p68 = scmp.eq.s32.totalorder %s9, 1
    %p69 = scmp.ne.s32.totalorder %s64, %s66
    %p70 = scmp.eq.s32.totalorder %s9, 0
    %p71 = por %p69, %p70
    %p72 = scmp.ne.s32.totalorder %s64, %s66
    %p73 = scmp.eq.s32.totalorder %s14, 1
    %p74 = por %p72, %p73
    %p75 = scmp.ne.s32.totalorder %s66, %s67
    %p76 = scmp.eq.s32.totalorder %s14, 0
    %p77 = por %p75, %p76
    %p78 = scmp.ne.s32.totalorder %s66, %s67
    %p79 = scmp.eq.s32.totalorder %s15, 1
    %p80 = por %p78, %p79
    %p82 = scmp.ne.s32.totalorder %s67, %s81
    %p83 = scmp.eq.s32.totalorder %s15, 0
    %p84 = por %p82, %p83
    %s85 = ssub.s32 %s9, %s16
    %p86 = scmp.eq.s32.totalorder %s85, 0
    %s88 = sadd.s32 %s87, 1
    %s89 = scalar_select %p86, %s87, %s88
    %p92 = pneg %p86
    %p93 = scmp.eq.s32.totalorder %s9, 1
    %p94 = por %p92, %p93
    %p95 = scmp.ne.s32.totalorder %s87, %s90
    %p96 = scmp.eq.s32.totalorder %s9, 0
    %p97 = por %p95, %p96
    %p98 = scmp.ne.s32.totalorder %s87, %s90
    %p99 = scmp.eq.s32.totalorder %s14, 1
    %p100 = por %p98, %p99
    %p101 = scmp.ne.s32.totalorder %s90, %s91
    %p102 = scmp.eq.s32.totalorder %s14, 0
    %p103 = por %p101, %p102
    %p104 = scmp.ne.s32.totalorder %s90, %s91
    %p105 = scmp.eq.s32.totalorder %s15, 1
    %p106 = por %p104, %p105
    %p108 = scmp.ne.s32.totalorder %s91, %s107
    %p109 = scmp.eq.s32.totalorder %s15, 0
    %p110 = por %p108, %p109
    %p111 = scmp.le.s32.totalorder 1, %s9
    %p112 = scmp.lt.s32.totalorder %s9, 3
    %p113 = pnand %p111, %p112
    %p114 = pneg %p113
    // Predicated region
    $region9: #{tpu_custom_call.1} parent=5 // pred_check
      _
    $region10: #{tpu_custom_call.1} parent=5 // pred_check_branch
      %116 = sbr.rel (%p113) target = $region12
    $region11: #{tpu_custom_call.1} parent=5 // pred_region
      %s117 = ssub.s32 %s9, 1
      // Predicated region
      $region13: #{tpu_custom_call.1} parent=11 // pred_check
        %p118 = pneg %p56
      $region14: #{tpu_custom_call.1} parent=11 // pred_check_branch
        %120 = sbr.rel (%p118) target = $region16
      $region15: #{tpu_custom_call.1} parent=11 // pred_region
        _
      $region16: #{tpu_custom_call.1} parent=11 // pred_fallthru
        _
      // Predicated region
      $region17: #{tpu_custom_call.1} parent=11 // pred_check
        %p121 = pneg %p77
      $region18: #{tpu_custom_call.1} parent=11 // pred_check_branch
        %123 = sbr.rel (%p121) target = $region20
      $region19: #{tpu_custom_call.1} parent=11 // pred_region
        _
      $region20: #{tpu_custom_call.1} parent=11 // pred_fallthru
        _
    $region12: #{tpu_custom_call.1} parent=5 // pred_fallthru
      _
    %p124 = scmp.lt.s32.totalorder %s9, 2
    // Predicated region
    $region21: #{tpu_custom_call.1} parent=5 // pred_check
      %p125 = pneg %p124
    $region22: #{tpu_custom_call.1} parent=5 // pred_check_branch
      %127 = sbr.rel (%p125) target = $region24
    $region23: #{tpu_custom_call.1} parent=5 // pred_region
      // Predicated region
      $region25: #{tpu_custom_call.1} parent=23 // pred_check
        %p128 = pneg %p29
      $region26: #{tpu_custom_call.1} parent=23 // pred_check_branch
        %130 = sbr.rel (%p128) target = $region28
      $region27: #{tpu_custom_call.1} parent=23 // pred_region
        %p131 = scmp.lt.s32.totalorder %s9, 1
        %s132 = scalar_select %p131, %s9, 1
        %s133 = smul.addr %s132, 2
        %s134 = smul.addr %s133, 4
        %s135 = scalar_lea.vmem %s0, %s134
      $region28: #{tpu_custom_call.1} parent=23 // pred_fallthru
        _
    $region24: #{tpu_custom_call.1} parent=5 // pred_fallthru
      _
    %p136 = scmp.le.s32.totalorder 1, %s9
    %p137 = scmp.lt.s32.totalorder %s9, 3
    %p138 = pnand %p136, %p137
    %p139 = pneg %p138
    // Predicated region
    $region29: #{tpu_custom_call.1} parent=5 // pred_check
      _
    $region30: #{tpu_custom_call.1} parent=5 // pred_check_branch
      %141 = sbr.rel (%p138) target = $region32
    $region31: #{tpu_custom_call.1} parent=5 // pred_region
      %s142 = ssub.s32 %s9, 1
      %p143 = scmp.lt.s32.totalorder %s14, 1
      %s144 = scalar_select %p143, %s14, 1
      %s145 = smul.addr %s144, 2
      %s146 = smul.addr %s145, 4
      %s147 = scalar_lea.vmem %s0, %s146
      %p148 = pneg %p35
      %p149 = pneg %p32
      %p150 = pneg %p56
      %p151 = pneg %p53
      %p152 = pneg %p77
      %p153 = pneg %p74
      %p154 = pneg %p103
      %p155 = pneg %p100
      %p156 = scmp.lt.s32.totalorder %s14, 1
      %s157 = scalar_select %p156, %s14, 1
      %s158 = smul.addr %s157, 2
      %s159 = smul.addr %s158, 4
      %s160 = scalar_lea.vmem %s3, %s159
      %p161 = scmp.lt.s32.totalorder %s14, 1
      %s162 = scalar_select %p161, %s14, 1
      %s163 = smul.addr %s162, 2
      %s164 = smul.addr %s163, 4
      %s165 = scalar_lea.vmem %s0, %s164
      %p166 = scmp.lt.s32.totalorder %s14, 1
      %s167 = scalar_select %p166, %s14, 1
      %s168 = smul.addr %s167, 2
      %s169 = smul.addr %s168, 4
      %s170 = scalar_lea.vmem %s3, %s169
      %v171 = vlaneseq
      %v172 = vand.u32 %v171, 127
      %v173 = vadd.s32 %v172, 128
      %vm174 = vcmp.lt.s32.totalorder %v172, 0
      %v175 = vsub.s32 0, %v172
      %v176 = vsel %vm174, %v175, %v172
      %v177 = vshrl.u32 %v176, 4
      %v178 = vand.u32 %v176, 15
      %v179 = vsub.s32 0, %v178
      %v180 = vsel %vm174, %v179, %v178
      %vm181 = vcmp.lt.s32.totalorder %v173, 0
      %v182 = vsub.s32 0, %v173
      %v183 = vsel %vm181, %v182, %v173
      %v184 = vshrl.u32 %v183, 4
      %v185 = vand.u32 %v183, 15
      %v186 = vsub.s32 0, %v185
      %v187 = vsel %vm181, %v186, %v185
      %vm188 = vcmp.ne.s32.totalorder %v180, 0
      %vm189 = vcmp.ne.s32.totalorder %v187, 0
      %vm190 = vcmp.lt.s32.totalorder %v180, 0
      %vm191 = vcmp.lt.s32.totalorder %v187, 0
      %vm192 = vmand %vm190, %vm188
      %vm193 = vmand %vm191, %vm189
      %v194 = vadd.s32 %v180, 16
      %v195 = vadd.s32 %v187, 16
      %v196 = vsel %vm192, %v194, %v180
      %v197 = vsel %vm193, %v195, %v187
      %vm198 = vcmp.ge.s32.totalorder %v196, 1
      %vm199 = vcmp.ge.s32.totalorder %v197, 1
      %vm200 = vcmp.le.s32.totalorder %v196, 14
      %vm201 = vcmp.le.s32.totalorder %v197, 14
      %v202 = vld [vmem:[%s165] sm:$0x77]
      %v204 = vcombine.high %v202, %v202
      %205 = vrot.lane.b32.xlu0 %v202, 17
      %v206 = vpop.permute.xlu0 %205
      %207 = vrot.lane.b32.xlu0 %v204, 17
      %v208 = vpop.permute.xlu0 %207
      %vm209 = vcmask 138240
      %v210 = vsel %vm209, %v206, %v208
      %v214 = vsel %vm209, 0.0, %v206
      %v215 = vsel %vm209, %v208, 0.0
      %v216 = vsel %vm198, 1, 0
      %v217 = vsel %vm199, 1, 0
      %vm218 = vcmp.eq.s32.totalorder %v216, 1
      %vm219 = vcmp.eq.s32.totalorder %v217, 1
      %v220 = vsel %vm218, %v214, 0.0
      %v221 = vsel %vm219, %v210, 0.0
      %v222 = vld [vmem:[%s1] sm:$0xff]
      %v223 = vld [vmem:[%s1 + $0x8] sm:$0xff]
      %s224 = scalar_lea.vmem %s1, 16
      %v225 = vld [vmem:[%s224] sm:$0xff]
      %v226 = vld [vmem:[%s224 + $0x8] sm:$0xff]
      %229 = vrot.lane.b32.xlu0 %v214, 127
      %v230 = vpop.permute.xlu0 %229
      %231 = vrot.lane.b32.xlu0 %v210, 127
      %v232 = vpop.permute.xlu0 %231
      %233 = vrot.lane.b32.xlu0 %v215, 127
      %v234 = vpop.permute.xlu0 %233
      %vm235 = vcmask 1039360
      %v236 = vsel %vm235, %v230, %v232
      %v237 = vsel %vm235, %v232, %v234
      %vm238 = vcmask 23552
      %v240 = vsel %vm238, %v225, 0
      %v243 = vsel %vm238, %v226, 0
      %vm245 = vcmask 1042432
      %v246 = vsel %vm245, %v236, 0
      %v248 = vsel %vm245, %v237, 0
      %250 = vmatprep.subr.mxu0 %v248
      %251 = vmatpush1.msra.mxu0 %v246
      %252 = vmatprep.subr.mxu0 0.0
      %253 = vmatpush1.msra.mxu0 0.0
      %254 = vmatprep.subr.mxu0 0.0
      %255 = vmatpush1.msra.mxu0 0.0
      %256 = vmatprep.subr.mxu0 0.0
      %257 = vmatpush1.msra.mxu0 0.0
      %258 = vmatprep.subr.mxu0 0.0
      %259 = vmatpush1.msra.mxu0 0.0
      %260 = vmatprep.subr.mxu0 0.0
      %261 = vmatpush1.msra.mxu0 0.0
      %262 = vmatprep.subr.mxu0 0.0
      %263 = vmatpush1.msra.mxu0 0.0
      %264 = vmatprep.subr.mxu0 0.0
      %265 = vmatpush1.msra.mxu0 0.0
      %266 = vmatprep.subr.mxu0 0.0
      %267 = vmatpush1.msra.mxu0 0.0
      %268 = vmatprep.subr.mxu0 0.0
      %269 = vmatpush1.msra.mxu0 0.0
      %270 = vmatprep.subr.mxu0 0.0
      %271 = vmatpush1.msra.mxu0 0.0
      %272 = vmatprep.subr.mxu0 0.0
      %273 = vmatpush1.msra.mxu0 0.0
      %274 = vmatprep.subr.mxu0 0.0
      %275 = vmatpush1.msra.mxu0 0.0
      %276 = vmatprep.subr.mxu0 0.0
      %277 = vmatpush1.msra.mxu0 0.0
      %278 = vmatprep.subr.mxu0 0.0
      %279 = vmatpush1.msra.mxu0 0.0
      %280 = vmatprep.subr.mxu0 0.0
      %281 = vmatpush1.msra.mxu0 0.0
      %282 = vmatprep.subr.mxu0 0.0
      %283 = vmatpush1.msra.mxu0 0.0
      %284 = vmatprep.subr.mxu0 0.0
      %285 = vmatpush1.msra.mxu0 0.0
      %286 = vmatprep.subr.mxu0 0.0
      %287 = vmatpush1.msra.mxu0 0.0
      %288 = vmatprep.subr.mxu0 0.0
      %289 = vmatpush1.msra.mxu0 0.0
      %290 = vmatprep.subr.mxu0 0.0
      %291 = vmatpush1.msra.mxu0 0.0
      %292 = vmatprep.subr.mxu0 0.0
      %293 = vmatpush1.msra.mxu0 0.0
      %294 = vmatprep.subr.mxu0 0.0
      %295 = vmatpush1.msra.mxu0 0.0
      %296 = vmatprep.subr.mxu0 0.0
      %297 = vmatpush1.msra.mxu0 0.0
      %298 = vmatprep.subr.mxu0 0.0
      %299 = vmatpush1.msra.mxu0 0.0
      %300 = vmatprep.subr.mxu0 0.0
      %301 = vmatpush1.msra.mxu0 0.0
      %302 = vmatprep.subr.mxu0 0.0
      %303 = vmatpush1.msra.mxu0 0.0
      %304 = vmatprep.subr.mxu0 0.0
      %305 = vmatpush1.msra.mxu0 0.0
      %306 = vmatprep.subr.mxu0 0.0
      %307 = vmatpush1.msra.mxu0 0.0
      %308 = vmatprep.subr.mxu0 0.0
      %309 = vmatpush1.msra.mxu0 0.0
      %310 = vmatprep.subr.mxu0 0.0
      %311 = vmatpush1.msra.mxu0 0.0
      %312 = vmatprep.subr.mxu0 0.0
      %313 = vmatpush1.msra.mxu0 0.0
      %314 = vmatprep.mubr.f32.mxu0 0.0
      %315 = vmatmul.mubr.f32.gmra.mrb[0].mxu0 %v240
      %v316 = vpop.f32.mrb[0].mxu0
      %v317 = vadd.f32 0.0, %v316
      %v318 = vpop.f32.mrb[0].mxu0
      %v319 = vadd.f32 0.0, %v318
      %320 = vmatprep.mubr.f32.mxu0 0.0
      %321 = vmatmul.mubr.f32.gmra.mrb[0].mxu0 %v243
      %v322 = vpop.f32.mrb[0].mxu0
      %v323 = vadd.f32 0.0, %v322
      %v324 = vpop.f32.mrb[0].mxu0
      %v325 = vadd.f32 0.0, %v324
      %326 = vdwg.mxu0
      %v328 = vsel %vm238, %v222, 0
      %v331 = vsel %vm238, %v223, 0
      %v334 = vsel %vm245, %v220, 0
      %v337 = vsel %vm245, %v221, 0
      %339 = vmatprep.subr.mxu0 %v337
      %340 = vmatpush1.msra.mxu0 %v334
      %341 = vmatprep.subr.mxu0 0.0
      %342 = vmatpush1.msra.mxu0 0.0
      %343 = vmatprep.subr.mxu0 0.0
      %344 = vmatpush1.msra.mxu0 0.0
      %345 = vmatprep.subr.mxu0 0.0
      %346 = vmatpush1.msra.mxu0 0.0
      %347 = vmatprep.subr.mxu0 0.0
      %348 = vmatpush1.msra.mxu0 0.0
      %349 = vmatprep.subr.mxu0 0.0
      %350 = vmatpush1.msra.mxu0 0.0
      %351 = vmatprep.subr.mxu0 0.0
      %352 = vmatpush1.msra.mxu0 0.0
      %353 = vmatprep.subr.mxu0 0.0
      %354 = vmatpush1.msra.mxu0 0.0
      %355 = vmatprep.subr.mxu0 0.0
      %356 = vmatpush1.msra.mxu0 0.0
      %357 = vmatprep.subr.mxu0 0.0
      %358 = vmatpush1.msra.mxu0 0.0
      %359 = vmatprep.subr.mxu0 0.0
      %360 = vmatpush1.msra.mxu0 0.0
      %361 = vmatprep.subr.mxu0 0.0
      %362 = vmatpush1.msra.mxu0 0.0
      %363 = vmatprep.subr.mxu0 0.0
      %364 = vmatpush1.msra.mxu0 0.0
      %365 = vmatprep.subr.mxu0 0.0
      %366 = vmatpush1.msra.mxu0 0.0
      %367 = vmatprep.subr.mxu0 0.0
      %368 = vmatpush1.msra.mxu0 0.0
      %369 = vmatprep.subr.mxu0 0.0
      %370 = vmatpush1.msra.mxu0 0.0
      %371 = vmatprep.subr.mxu0 0.0
      %372 = vmatpush1.msra.mxu0 0.0
      %373 = vmatprep.subr.mxu0 0.0
      %374 = vmatpush1.msra.mxu0 0.0
      %375 = vmatprep.subr.mxu0 0.0
      %376 = vmatpush1.msra.mxu0 0.0
      %377 = vmatprep.subr.mxu0 0.0
      %378 = vmatpush1.msra.mxu0 0.0
      %379 = vmatprep.subr.mxu0 0.0
      %380 = vmatpush1.msra.mxu0 0.0
      %381 = vmatprep.subr.mxu0 0.0
      %382 = vmatpush1.msra.mxu0 0.0
      %383 = vmatprep.subr.mxu0 0.0
      %384 = vmatpush1.msra.mxu0 0.0
      %385 = vmatprep.subr.mxu0 0.0
      %386 = vmatpush1.msra.mxu0 0.0
      %387 = vmatprep.subr.mxu0 0.0
      %388 = vmatpush1.msra.mxu0 0.0
      %389 = vmatprep.subr.mxu0 0.0
      %390 = vmatpush1.msra.mxu0 0.0
      %391 = vmatprep.subr.mxu0 0.0
      %392 = vmatpush1.msra.mxu0 0.0
      %393 = vmatprep.subr.mxu0 0.0
      %394 = vmatpush1.msra.mxu0 0.0
      %395 = vmatprep.subr.mxu0 0.0
      %396 = vmatpush1.msra.mxu0 0.0
      %397 = vmatprep.subr.mxu0 0.0
      %398 = vmatpush1.msra.mxu0 0.0
      %399 = vmatprep.subr.mxu0 0.0
      %400 = vmatpush1.msra.mxu0 0.0
      %401 = vmatprep.subr.mxu0 0.0
      %402 = vmatpush1.msra.mxu0 0.0
      %403 = vmatprep.mubr.f32.mxu0 0.0
      %404 = vmatmul.mubr.f32.gmra.mrb[0].mxu0 %v328
      %v405 = vpop.f32.mrb[0].mxu0
      %v406 = vadd.f32 %v317, %v405
      %v407 = vpop.f32.mrb[0].mxu0
      %v408 = vadd.f32 %v319, %v407
      %409 = vmatprep.mubr.f32.mxu0 0.0
      %410 = vmatmul.mubr.f32.gmra.mrb[0].mxu0 %v331
      %v411 = vpop.f32.mrb[0].mxu0
      %v412 = vadd.f32 %v323, %v411
      %v413 = vpop.f32.mrb[0].mxu0
      %v414 = vadd.f32 %v325, %v413
      %415 = vdwg.mxu0
      %v416 = vsel %vm200, 1, 0
      %v417 = vsel %vm201, 1, 0
      %vm418 = vcmp.eq.s32.totalorder %v416, 1
      %vm419 = vcmp.eq.s32.totalorder %v417, 1
      %420 = vrot.lane.b32.xlu0 %v214, 126
      %v421 = vpop.permute.xlu0 %420
      %422 = vrot.lane.b32.xlu0 %v210, 126
      %v423 = vpop.permute.xlu0 %422
      %424 = vrot.lane.b32.xlu0 %v215, 126
      %v425 = vpop.permute.xlu0 %424
      %vm426 = vcmask 1031168
      %v427 = vsel %vm426, %v421, %v423
      %v428 = vsel %vm426, %v423, %v425
      %v431 = vsel %vm418, %v427, 0.0
      %v432 = vsel %vm419, %v428, 0.0
      %s433 = scalar_lea.vmem %s1, 32
      %v434 = vld [vmem:[%s433] sm:$0xff]
      %v435 = vld [vmem:[%s433 + $0x8] sm:$0xff]
      %v437 = vsel %vm238, %v434, 0
      %v440 = vsel %vm238, %v435, 0
      %v443 = vsel %vm245, %v431, 0
      %v446 = vsel %vm245, %v432, 0
      %448 = vmatprep.subr.mxu0 %v446
      %449 = vmatpush1.msra.mxu0 %v443
      %450 = vmatprep.subr.mxu0 0.0
      %451 = vmatpush1.msra.mxu0 0.0
      %452 = vmatprep.subr.mxu0 0.0
      %453 = vmatpush1.msra.mxu0 0.0
      %454 = vmatprep.subr.mxu0 0.0
      %455 = vmatpush1.msra.mxu0 0.0
      %456 = vmatprep.subr.mxu0 0.0
      %457 = vmatpush1.msra.mxu0 0.0
      %458 = vmatprep.subr.mxu0 0.0
      %459 = vmatpush1.msra.mxu0 0.0
      %460 = vmatprep.subr.mxu0 0.0
      %461 = vmatpush1.msra.mxu0 0.0
      %462 = vmatprep.subr.mxu0 0.0
      %463 = vmatpush1.msra.mxu0 0.0
      %464 = vmatprep.subr.mxu0 0.0
      %465 = vmatpush1.msra.mxu0 0.0
      %466 = vmatprep.subr.mxu0 0.0
      %467 = vmatpush1.msra.mxu0 0.0
      %468 = vmatprep.subr.mxu0 0.0
      %469 = vmatpush1.msra.mxu0 0.0
      %470 = vmatprep.subr.mxu0 0.0
      %471 = vmatpush1.msra.mxu0 0.0
      %472 = vmatprep.subr.mxu0 0.0
      %473 = vmatpush1.msra.mxu0 0.0
      %474 = vmatprep.subr.mxu0 0.0
      %475 = vmatpush1.msra.mxu0 0.0
      %476 = vmatprep.subr.mxu0 0.0
      %477 = vmatpush1.msra.mxu0 0.0
      %478 = vmatprep.subr.mxu0 0.0
      %479 = vmatpush1.msra.mxu0 0.0
      %480 = vmatprep.subr.mxu0 0.0
      %481 = vmatpush1.msra.mxu0 0.0
      %482 = vmatprep.subr.mxu0 0.0
      %483 = vmatpush1.msra.mxu0 0.0
      %484 = vmatprep.subr.mxu0 0.0
      %485 = vmatpush1.msra.mxu0 0.0
      %486 = vmatprep.subr.mxu0 0.0
      %487 = vmatpush1.msra.mxu0 0.0
      %488 = vmatprep.subr.mxu0 0.0
      %489 = vmatpush1.msra.mxu0 0.0
      %490 = vmatprep.subr.mxu0 0.0
      %491 = vmatpush1.msra.mxu0 0.0
      %492 = vmatprep.subr.mxu0 0.0
      %493 = vmatpush1.msra.mxu0 0.0
      %494 = vmatprep.subr.mxu0 0.0
      %495 = vmatpush1.msra.mxu0 0.0
      %496 = vmatprep.subr.mxu0 0.0
      %497 = vmatpush1.msra.mxu0 0.0
      %498 = vmatprep.subr.mxu0 0.0
      %499 = vmatpush1.msra.mxu0 0.0
      %500 = vmatprep.subr.mxu0 0.0
      %501 = vmatpush1.msra.mxu0 0.0
      %502 = vmatprep.subr.mxu0 0.0
      %503 = vmatpush1.msra.mxu0 0.0
      %504 = vmatprep.subr.mxu0 0.0
      %505 = vmatpush1.msra.mxu0 0.0
      %506 = vmatprep.subr.mxu0 0.0
      %507 = vmatpush1.msra.mxu0 0.0
      %508 = vmatprep.subr.mxu0 0.0
      %509 = vmatpush1.msra.mxu0 0.0
      %510 = vmatprep.subr.mxu0 0.0
      %511 = vmatpush1.msra.mxu0 0.0
      %512 = vmatprep.mubr.f32.mxu0 0.0
      %513 = vmatmul.mubr.f32.gmra.mrb[0].mxu0 %v437
      %v514 = vpop.f32.mrb[0].mxu0
      %v515 = vadd.f32 0.0, %v514
      %v516 = vpop.f32.mrb[0].mxu0
      %v517 = vadd.f32 0.0, %v516
      %518 = vmatprep.mubr.f32.mxu0 0.0
      %519 = vmatmul.mubr.f32.gmra.mrb[0].mxu0 %v440
      %v520 = vpop.f32.mrb[0].mxu0
      %v521 = vadd.f32 0.0, %v520
      %v522 = vpop.f32.mrb[0].mxu0
      %v523 = vadd.f32 0.0, %v522
      %524 = vdwg.mxu0
      %v525 = vadd.f32 %v406, %v515
      %v526 = vadd.f32 %v408, %v517
      %v527 = vadd.f32 %v412, %v521
      %v528 = vadd.f32 %v414, %v523
      %529 = vrot.lane.b32.xlu0 %v214, 112
      %v530 = vpop.permute.xlu0 %529
      %531 = vrot.lane.b32.xlu0 %v210, 112
      %v532 = vpop.permute.xlu0 %531
      %533 = vrot.lane.b32.xlu0 %v215, 112
      %v534 = vpop.permute.xlu0 %533
      %vm535 = vcmask 916480
      %v536 = vsel %vm535, %v530, %v532
      %v537 = vsel %vm535, %v532, %v534
      %v540 = vsel %vm218, %v536, 0.0
      %v541 = vsel %vm219, %v537, 0.0
      %s542 = scalar_lea.vmem %s1, 48
      %v543 = vld [vmem:[%s542] sm:$0xff]
      %v544 = vld [vmem:[%s542 + $0x8] sm:$0xff]
      %v546 = vsel %vm238, %v543, 0
      %v549 = vsel %vm238, %v544, 0
      %v552 = vsel %vm245, %v540, 0
      %v555 = vsel %vm245, %v541, 0
      %557 = vmatprep.subr.mxu0 %v555
      %558 = vmatpush1.msra.mxu0 %v552
      %559 = vmatprep.subr.mxu0 0.0
      %560 = vmatpush1.msra.mxu0 0.0
      %561 = vmatprep.subr.mxu0 0.0
      %562 = vmatpush1.msra.mxu0 0.0
      %563 = vmatprep.subr.mxu0 0.0
      %564 = vmatpush1.msra.mxu0 0.0
      %565 = vmatprep.subr.mxu0 0.0
      %566 = vmatpush1.msra.mxu0 0.0
      %567 = vmatprep.subr.mxu0 0.0
      %568 = vmatpush1.msra.mxu0 0.0
      %569 = vmatprep.subr.mxu0 0.0
      %570 = vmatpush1.msra.mxu0 0.0
      %571 = vmatprep.subr.mxu0 0.0
      %572 = vmatpush1.msra.mxu0 0.0
      %573 = vmatprep.subr.mxu0 0.0
      %574 = vmatpush1.msra.mxu0 0.0
      %575 = vmatprep.subr.mxu0 0.0
      %576 = vmatpush1.msra.mxu0 0.0
      %577 = vmatprep.subr.mxu0 0.0
      %578 = vmatpush1.msra.mxu0 0.0
      %579 = vmatprep.subr.mxu0 0.0
      %580 = vmatpush1.msra.mxu0 0.0
      %581 = vmatprep.subr.mxu0 0.0
      %582 = vmatpush1.msra.mxu0 0.0
      %583 = vmatprep.subr.mxu0 0.0
      %584 = vmatpush1.msra.mxu0 0.0
      %585 = vmatprep.subr.mxu0 0.0
      %586 = vmatpush1.msra.mxu0 0.0
      %587 = vmatprep.subr.mxu0 0.0
      %588 = vmatpush1.msra.mxu0 0.0
      %589 = vmatprep.subr.mxu0 0.0
      %590 = vmatpush1.msra.mxu0 0.0
      %591 = vmatprep.subr.mxu0 0.0
      %592 = vmatpush1.msra.mxu0 0.0
      %593 = vmatprep.subr.mxu0 0.0
      %594 = vmatpush1.msra.mxu0 0.0
      %595 = vmatprep.subr.mxu0 0.0
      %596 = vmatpush1.msra.mxu0 0.0
      %597 = vmatprep.subr.mxu0 0.0
      %598 = vmatpush1.msra.mxu0 0.0
      %599 = vmatprep.subr.mxu0 0.0
      %600 = vmatpush1.msra.mxu0 0.0
      %601 = vmatprep.subr.mxu0 0.0
      %602 = vmatpush1.msra.mxu0 0.0
      %603 = vmatprep.subr.mxu0 0.0
      %604 = vmatpush1.msra.mxu0 0.0
      %605 = vmatprep.subr.mxu0 0.0
      %606 = vmatpush1.msra.mxu0 0.0
      %607 = vmatprep.subr.mxu0 0.0
      %608 = vmatpush1.msra.mxu0 0.0
      %609 = vmatprep.subr.mxu0 0.0
      %610 = vmatpush1.msra.mxu0 0.0
      %611 = vmatprep.subr.mxu0 0.0
      %612 = vmatpush1.msra.mxu0 0.0
      %613 = vmatprep.subr.mxu0 0.0
      %614 = vmatpush1.msra.mxu0 0.0
      %615 = vmatprep.subr.mxu0 0.0
      %616 = vmatpush1.msra.mxu0 0.0
      %617 = vmatprep.subr.mxu0 0.0
      %618 = vmatpush1.msra.mxu0 0.0
      %619 = vmatprep.subr.mxu0 0.0
      %620 = vmatpush1.msra.mxu0 0.0
      %621 = vmatprep.mubr.f32.mxu0 0.0
      %622 = vmatmul.mubr.f32.gmra.mrb[0].mxu0 %v546
      %v623 = vpop.f32.mrb[0].mxu0
      %v624 = vadd.f32 0.0, %v623
      %v625 = vpop.f32.mrb[0].mxu0
      %v626 = vadd.f32 0.0, %v625
      %627 = vmatprep.mubr.f32.mxu0 0.0
      %628 = vmatmul.mubr.f32.gmra.mrb[0].mxu0 %v549
      %v629 = vpop.f32.mrb[0].mxu0
      %v630 = vadd.f32 0.0, %v629
      %v631 = vpop.f32.mrb[0].mxu0
      %v632 = vadd.f32 0.0, %v631
      %633 = vdwg.mxu0
      %v634 = vadd.f32 %v525, %v624
      %v635 = vadd.f32 %v526, %v626
      %v636 = vadd.f32 %v527, %v630
      %v637 = vadd.f32 %v528, %v632
      %s638 = scalar_lea.vmem %s1, 64
      %v639 = vld [vmem:[%s638] sm:$0xff]
      %v640 = vld [vmem:[%s638 + $0x8] sm:$0xff]
      %641 = vrot.lane.b32.xlu0 %v214, 111
      %v642 = vpop.permute.xlu0 %641
      %643 = vrot.lane.b32.xlu0 %v210, 111
      %v644 = vpop.permute.xlu0 %643
      %645 = vrot.lane.b32.xlu0 %v215, 111
      %v646 = vpop.permute.xlu0 %645
      %vm647 = vcmask 908288
      %v648 = vsel %vm647, %v642, %v644
      %v649 = vsel %vm647, %v644, %v646
      %v651 = vsel %vm238, %v639, 0
      %v654 = vsel %vm238, %v640, 0
      %v656 = vsel %vm245, %v648, 0
      %v658 = vsel %vm245, %v649, 0
      %660 = vmatprep.subr.mxu0 %v658
      %661 = vmatpush1.msra.mxu0 %v656
      %662 = vmatprep.subr.mxu0 0.0
      %663 = vmatpush1.msra.mxu0 0.0
      %664 = vmatprep.subr.mxu0 0.0
      %665 = vmatpush1.msra.mxu0 0.0
      %666 = vmatprep.subr.mxu0 0.0
      %667 = vmatpush1.msra.mxu0 0.0
      %668 = vmatprep.subr.mxu0 0.0
      %669 = vmatpush1.msra.mxu0 0.0
      %670 = vmatprep.subr.mxu0 0.0
      %671 = vmatpush1.msra.mxu0 0.0
      %672 = vmatprep.subr.mxu0 0.0
      %673 = vmatpush1.msra.mxu0 0.0
      %674 = vmatprep.subr.mxu0 0.0
      %675 = vmatpush1.msra.mxu0 0.0
      %676 = vmatprep.subr.mxu0 0.0
      %677 = vmatpush1.msra.mxu0 0.0
      %678 = vmatprep.subr.mxu0 0.0
      %679 = vmatpush1.msra.mxu0 0.0
      %680 = vmatprep.subr.mxu0 0.0
      %681 = vmatpush1.msra.mxu0 0.0
      %682 = vmatprep.subr.mxu0 0.0
      %683 = vmatpush1.msra.mxu0 0.0
      %684 = vmatprep.subr.mxu0 0.0
      %685 = vmatpush1.msra.mxu0 0.0
      %686 = vmatprep.subr.mxu0 0.0
      %687 = vmatpush1.msra.mxu0 0.0
      %688 = vmatprep.subr.mxu0 0.0
      %689 = vmatpush1.msra.mxu0 0.0
      %690 = vmatprep.subr.mxu0 0.0
      %691 = vmatpush1.msra.mxu0 0.0
      %692 = vmatprep.subr.mxu0 0.0
      %693 = vmatpush1.msra.mxu0 0.0
      %694 = vmatprep.subr.mxu0 0.0
      %695 = vmatpush1.msra.mxu0 0.0
      %696 = vmatprep.subr.mxu0 0.0
      %697 = vmatpush1.msra.mxu0 0.0
      %698 = vmatprep.subr.mxu0 0.0
      %699 = vmatpush1.msra.mxu0 0.0
      %700 = vmatprep.subr.mxu0 0.0
      %701 = vmatpush1.msra.mxu0 0.0
      %702 = vmatprep.subr.mxu0 0.0
      %703 = vmatpush1.msra.mxu0 0.0
      %704 = vmatprep.subr.mxu0 0.0
      %705 = vmatpush1.msra.mxu0 0.0
      %706 = vmatprep.subr.mxu0 0.0
      %707 = vmatpush1.msra.mxu0 0.0
      %708 = vmatprep.subr.mxu0 0.0
      %709 = vmatpush1.msra.mxu0 0.0
      %710 = vmatprep.subr.mxu0 0.0
      %711 = vmatpush1.msra.mxu0 0.0
      %712 = vmatprep.subr.mxu0 0.0
      %713 = vmatpush1.msra.mxu0 0.0
      %714 = vmatprep.subr.mxu0 0.0
      %715 = vmatpush1.msra.mxu0 0.0
      %716 = vmatprep.subr.mxu0 0.0
      %717 = vmatpush1.msra.mxu0 0.0
      %718 = vmatprep.subr.mxu0 0.0
      %719 = vmatpush1.msra.mxu0 0.0
      %720 = vmatprep.subr.mxu0 0.0
      %721 = vmatpush1.msra.mxu0 0.0
      %722 = vmatprep.subr.mxu0 0.0
      %723 = vmatpush1.msra.mxu0 0.0
      %724 = vmatprep.mubr.f32.mxu0 0.0
      %725 = vmatmul.mubr.f32.gmra.mrb[0].mxu0 %v651
      %v726 = vpop.f32.mrb[0].mxu0
      %v727 = vadd.f32 0.0, %v726
      %v728 = vpop.f32.mrb[0].mxu0
      %v729 = vadd.f32 0.0, %v728
      %730 = vmatprep.mubr.f32.mxu0 0.0
      %731 = vmatmul.mubr.f32.gmra.mrb[0].mxu0 %v654
      %v732 = vpop.f32.mrb[0].mxu0
      %v733 = vadd.f32 0.0, %v732
      %v734 = vpop.f32.mrb[0].mxu0
      %v735 = vadd.f32 0.0, %v734
      %736 = vdwg.mxu0
      %v737 = vadd.f32 %v634, %v727
      %v738 = vadd.f32 %v635, %v729
      %v739 = vadd.f32 %v636, %v733
      %v740 = vadd.f32 %v637, %v735
      %741 = vrot.lane.b32.xlu0 %v214, 110
      %v742 = vpop.permute.xlu0 %741
      %743 = vrot.lane.b32.xlu0 %v210, 110
      %v744 = vpop.permute.xlu0 %743
      %745 = vrot.lane.b32.xlu0 %v215, 110
      %v746 = vpop.permute.xlu0 %745
      %vm747 = vcmask 900096
      %v748 = vsel %vm747, %v742, %v744
      %v749 = vsel %vm747, %v744, %v746
      %v752 = vsel %vm418, %v748, 0.0
      %v753 = vsel %vm419, %v749, 0.0
      %s754 = scalar_lea.vmem %s1, 80
      %v755 = vld [vmem:[%s754] sm:$0xff]
      %v756 = vld [vmem:[%s754 + $0x8] sm:$0xff]
      %v758 = vsel %vm238, %v755, 0
      %v761 = vsel %vm238, %v756, 0
      %v764 = vsel %vm245, %v752, 0
      %v767 = vsel %vm245, %v753, 0
      %769 = vmatprep.subr.mxu0 %v767
      %770 = vmatpush1.msra.mxu0 %v764
      %771 = vmatprep.subr.mxu0 0.0
      %772 = vmatpush1.msra.mxu0 0.0
      %773 = vmatprep.subr.mxu0 0.0
      %774 = vmatpush1.msra.mxu0 0.0
      %775 = vmatprep.subr.mxu0 0.0
      %776 = vmatpush1.msra.mxu0 0.0
      %777 = vmatprep.subr.mxu0 0.0
      %778 = vmatpush1.msra.mxu0 0.0
      %779 = vmatprep.subr.mxu0 0.0
      %780 = vmatpush1.msra.mxu0 0.0
      %781 = vmatprep.subr.mxu0 0.0
      %782 = vmatpush1.msra.mxu0 0.0
      %783 = vmatprep.subr.mxu0 0.0
      %784 = vmatpush1.msra.mxu0 0.0
      %785 = vmatprep.subr.mxu0 0.0
      %786 = vmatpush1.msra.mxu0 0.0
      %787 = vmatprep.subr.mxu0 0.0
      %788 = vmatpush1.msra.mxu0 0.0
      %789 = vmatprep.subr.mxu0 0.0
      %790 = vmatpush1.msra.mxu0 0.0
      %791 = vmatprep.subr.mxu0 0.0
      %792 = vmatpush1.msra.mxu0 0.0
      %793 = vmatprep.subr.mxu0 0.0
      %794 = vmatpush1.msra.mxu0 0.0
      %795 = vmatprep.subr.mxu0 0.0
      %796 = vmatpush1.msra.mxu0 0.0
      %797 = vmatprep.subr.mxu0 0.0
      %798 = vmatpush1.msra.mxu0 0.0
      %799 = vmatprep.subr.mxu0 0.0
      %800 = vmatpush1.msra.mxu0 0.0
      %801 = vmatprep.subr.mxu0 0.0
      %802 = vmatpush1.msra.mxu0 0.0
      %803 = vmatprep.subr.mxu0 0.0
      %804 = vmatpush1.msra.mxu0 0.0
      %805 = vmatprep.subr.mxu0 0.0
      %806 = vmatpush1.msra.mxu0 0.0
      %807 = vmatprep.subr.mxu0 0.0
      %808 = vmatpush1.msra.mxu0 0.0
      %809 = vmatprep.subr.mxu0 0.0
      %810 = vmatpush1.msra.mxu0 0.0
      %811 = vmatprep.subr.mxu0 0.0
      %812 = vmatpush1.msra.mxu0 0.0
      %813 = vmatprep.subr.mxu0 0.0
      %814 = vmatpush1.msra.mxu0 0.0
      %815 = vmatprep.subr.mxu0 0.0
      %816 = vmatpush1.msra.mxu0 0.0
      %817 = vmatprep.subr.mxu0 0.0
      %818 = vmatpush1.msra.mxu0 0.0
      %819 = vmatprep.subr.mxu0 0.0
      %820 = vmatpush1.msra.mxu0 0.0
      %821 = vmatprep.subr.mxu0 0.0
      %822 = vmatpush1.msra.mxu0 0.0
      %823 = vmatprep.subr.mxu0 0.0
      %824 = vmatpush1.msra.mxu0 0.0
      %825 = vmatprep.subr.mxu0 0.0
      %826 = vmatpush1.msra.mxu0 0.0
      %827 = vmatprep.subr.mxu0 0.0
      %828 = vmatpush1.msra.mxu0 0.0
      %829 = vmatprep.subr.mxu0 0.0
      %830 = vmatpush1.msra.mxu0 0.0
      %831 = vmatprep.subr.mxu0 0.0
      %832 = vmatpush1.msra.mxu0 0.0
      %833 = vmatprep.mubr.f32.mxu0 0.0
      %834 = vmatmul.mubr.f32.gmra.mrb[0].mxu0 %v758
      %v835 = vpop.f32.mrb[0].mxu0
      %v836 = vadd.f32 0.0, %v835
      %v837 = vpop.f32.mrb[0].mxu0
      %v838 = vadd.f32 0.0, %v837
      %839 = vmatprep.mubr.f32.mxu0 0.0
      %840 = vmatmul.mubr.f32.gmra.mrb[0].mxu0 %v761
      %v841 = vpop.f32.mrb[0].mxu0
      %v842 = vadd.f32 0.0, %v841
      %v843 = vpop.f32.mrb[0].mxu0
      %v844 = vadd.f32 0.0, %v843
      %845 = vdwg.mxu0
      %v846 = vadd.f32 %v737, %v836
      %v847 = vadd.f32 %v738, %v838
      %v848 = vadd.f32 %v739, %v842
      %v849 = vadd.f32 %v740, %v844
      %850 = vrot.lane.b32.xlu0 %v214, 96
      %v851 = vpop.permute.xlu0 %850
      %852 = vrot.lane.b32.xlu0 %v210, 96
      %v853 = vpop.permute.xlu0 %852
      %854 = vrot.lane.b32.xlu0 %v215, 96
      %v855 = vpop.permute.xlu0 %854
      %vm856 = vcmask 785408
      %v857 = vsel %vm856, %v851, %v853
      %v858 = vsel %vm856, %v853, %v855
      %v861 = vsel %vm218, %v857, 0.0
      %v862 = vsel %vm219, %v858, 0.0
      %s863 = scalar_lea.vmem %s1, 96
      %v864 = vld [vmem:[%s863] sm:$0xff]
      %v865 = vld [vmem:[%s863 + $0x8] sm:$0xff]
      %v867 = vsel %vm238, %v864, 0
      %v870 = vsel %vm238, %v865, 0
      %v873 = vsel %vm245, %v861, 0
      %v876 = vsel %vm245, %v862, 0
      %878 = vmatprep.subr.mxu0 %v876
      %879 = vmatpush1.msra.mxu0 %v873
      %880 = vmatprep.subr.mxu0 0.0
      %881 = vmatpush1.msra.mxu0 0.0
      %882 = vmatprep.subr.mxu0 0.0
      %883 = vmatpush1.msra.mxu0 0.0
      %884 = vmatprep.subr.mxu0 0.0
      %885 = vmatpush1.msra.mxu0 0.0
      %886 = vmatprep.subr.mxu0 0.0
      %887 = vmatpush1.msra.mxu0 0.0
      %888 = vmatprep.subr.mxu0 0.0
      %889 = vmatpush1.msra.mxu0 0.0
      %890 = vmatprep.subr.mxu0 0.0
      %891 = vmatpush1.msra.mxu0 0.0
      %892 = vmatprep.subr.mxu0 0.0
      %893 = vmatpush1.msra.mxu0 0.0
      %894 = vmatprep.subr.mxu0 0.0
      %895 = vmatpush1.msra.mxu0 0.0
      %896 = vmatprep.subr.mxu0 0.0
      %897 = vmatpush1.msra.mxu0 0.0
      %898 = vmatprep.subr.mxu0 0.0
      %899 = vmatpush1.msra.mxu0 0.0
      %900 = vmatprep.subr.mxu0 0.0
      %901 = vmatpush1.msra.mxu0 0.0
      %902 = vmatprep.subr.mxu0 0.0
      %903 = vmatpush1.msra.mxu0 0.0
      %904 = vmatprep.subr.mxu0 0.0
      %905 = vmatpush1.msra.mxu0 0.0
      %906 = vmatprep.subr.mxu0 0.0
      %907 = vmatpush1.msra.mxu0 0.0
      %908 = vmatprep.subr.mxu0 0.0
      %909 = vmatpush1.msra.mxu0 0.0
      %910 = vmatprep.subr.mxu0 0.0
      %911 = vmatpush1.msra.mxu0 0.0
      %912 = vmatprep.subr.mxu0 0.0
      %913 = vmatpush1.msra.mxu0 0.0
      %914 = vmatprep.subr.mxu0 0.0
      %915 = vmatpush1.msra.mxu0 0.0
      %916 = vmatprep.subr.mxu0 0.0
      %917 = vmatpush1.msra.mxu0 0.0
      %918 = vmatprep.subr.mxu0 0.0
      %919 = vmatpush1.msra.mxu0 0.0
      %920 = vmatprep.subr.mxu0 0.0
      %921 = vmatpush1.msra.mxu0 0.0
      %922 = vmatprep.subr.mxu0 0.0
      %923 = vmatpush1.msra.mxu0 0.0
      %924 = vmatprep.subr.mxu0 0.0
      %925 = vmatpush1.msra.mxu0 0.0
      %926 = vmatprep.subr.mxu0 0.0
      %927 = vmatpush1.msra.mxu0 0.0
      %928 = vmatprep.subr.mxu0 0.0
      %929 = vmatpush1.msra.mxu0 0.0
      %930 = vmatprep.subr.mxu0 0.0
      %931 = vmatpush1.msra.mxu0 0.0
      %932 = vmatprep.subr.mxu0 0.0
      %933 = vmatpush1.msra.mxu0 0.0
      %934 = vmatprep.subr.mxu0 0.0
      %935 = vmatpush1.msra.mxu0 0.0
      %936 = vmatprep.subr.mxu0 0.0
      %937 = vmatpush1.msra.mxu0 0.0
      %938 = vmatprep.subr.mxu0 0.0
      %939 = vmatpush1.msra.mxu0 0.0
      %940 = vmatprep.subr.mxu0 0.0
      %941 = vmatpush1.msra.mxu0 0.0
      %942 = vmatprep.mubr.f32.mxu0 0.0
      %943 = vmatmul.mubr.f32.gmra.mrb[0].mxu0 %v867
      %v944 = vpop.f32.mrb[0].mxu0
      %v945 = vadd.f32 0.0, %v944
      %v946 = vpop.f32.mrb[0].mxu0
      %v947 = vadd.f32 0.0, %v946
      %948 = vmatprep.mubr.f32.mxu0 0.0
      %949 = vmatmul.mubr.f32.gmra.mrb[0].mxu0 %v870
      %v950 = vpop.f32.mrb[0].mxu0
      %v951 = vadd.f32 0.0, %v950
      %v952 = vpop.f32.mrb[0].mxu0
      %v953 = vadd.f32 0.0, %v952
      %954 = vdwg.mxu0
      %v955 = vadd.f32 %v846, %v945
      %v956 = vadd.f32 %v847, %v947
      %v957 = vadd.f32 %v848, %v951
      %v958 = vadd.f32 %v849, %v953
      %s959 = scalar_lea.vmem %s1, 112
      %v960 = vld [vmem:[%s959] sm:$0xff]
      %v961 = vld [vmem:[%s959 + $0x8] sm:$0xff]
      %962 = vrot.lane.b32.xlu0 %v214, 95
      %v963 = vpop.permute.xlu0 %962
      %964 = vrot.lane.b32.xlu0 %v210, 95
      %v965 = vpop.permute.xlu0 %964
      %966 = vrot.lane.b32.xlu0 %v215, 95
      %v967 = vpop.permute.xlu0 %966
      %vm968 = vcmask 777216
      %v969 = vsel %vm968, %v963, %v965
      %v970 = vsel %vm968, %v965, %v967
      %v972 = vsel %vm238, %v960, 0
      %v975 = vsel %vm238, %v961, 0
      %v977 = vsel %vm245, %v969, 0
      %v979 = vsel %vm245, %v970, 0
      %981 = vmatprep.subr.mxu0 %v979
      %982 = vmatpush1.msra.mxu0 %v977
      %983 = vmatprep.subr.mxu0 0.0
      %984 = vmatpush1.msra.mxu0 0.0
      %985 = vmatprep.subr.mxu0 0.0
      %986 = vmatpush1.msra.mxu0 0.0
      %987 = vmatprep.subr.mxu0 0.0
      %988 = vmatpush1.msra.mxu0 0.0
      %989 = vmatprep.subr.mxu0 0.0
      %990 = vmatpush1.msra.mxu0 0.0
      %991 = vmatprep.subr.mxu0 0.0
      %992 = vmatpush1.msra.mxu0 0.0
      %993 = vmatprep.subr.mxu0 0.0
      %994 = vmatpush1.msra.mxu0 0.0
      %995 = vmatprep.subr.mxu0 0.0
      %996 = vmatpush1.msra.mxu0 0.0
      %997 = vmatprep.subr.mxu0 0.0
      %998 = vmatpush1.msra.mxu0 0.0
      %999 = vmatprep.subr.mxu0 0.0
      %1000 = vmatpush1.msra.mxu0 0.0
      %1001 = vmatprep.subr.mxu0 0.0
      %1002 = vmatpush1.msra.mxu0 0.0
      %1003 = vmatprep.subr.mxu0 0.0
      %1004 = vmatpush1.msra.mxu0 0.0
      %1005 = vmatprep.subr.mxu0 0.0
      %1006 = vmatpush1.msra.mxu0 0.0
      %1007 = vmatprep.subr.mxu0 0.0
      %1008 = vmatpush1.msra.mxu0 0.0
      %1009 = vmatprep.subr.mxu0 0.0
      %1010 = vmatpush1.msra.mxu0 0.0
      %1011 = vmatprep.subr.mxu0 0.0
      %1012 = vmatpush1.msra.mxu0 0.0
      %1013 = vmatprep.subr.mxu0 0.0
      %1014 = vmatpush1.msra.mxu0 0.0
      %1015 = vmatprep.subr.mxu0 0.0
      %1016 = vmatpush1.msra.mxu0 0.0
      %1017 = vmatprep.subr.mxu0 0.0
      %1018 = vmatpush1.msra.mxu0 0.0
      %1019 = vmatprep.subr.mxu0 0.0
      %1020 = vmatpush1.msra.mxu0 0.0
      %1021 = vmatprep.subr.mxu0 0.0
      %1022 = vmatpush1.msra.mxu0 0.0
      %1023 = vmatprep.subr.mxu0 0.0
      %1024 = vmatpush1.msra.mxu0 0.0
      %1025 = vmatprep.subr.mxu0 0.0
      %1026 = vmatpush1.msra.mxu0 0.0
      %1027 = vmatprep.subr.mxu0 0.0
      %1028 = vmatpush1.msra.mxu0 0.0
      %1029 = vmatprep.subr.mxu0 0.0
      %1030 = vmatpush1.msra.mxu0 0.0
      %1031 = vmatprep.subr.mxu0 0.0
      %1032 = vmatpush1.msra.mxu0 0.0
      %1033 = vmatprep.subr.mxu0 0.0
      %1034 = vmatpush1.msra.mxu0 0.0
      %1035 = vmatprep.subr.mxu0 0.0
      %1036 = vmatpush1.msra.mxu0 0.0
      %1037 = vmatprep.subr.mxu0 0.0
      %1038 = vmatpush1.msra.mxu0 0.0
      %1039 = vmatprep.subr.mxu0 0.0
      %1040 = vmatpush1.msra.mxu0 0.0
      %1041 = vmatprep.subr.mxu0 0.0
      %1042 = vmatpush1.msra.mxu0 0.0
      %1043 = vmatprep.subr.mxu0 0.0
      %1044 = vmatpush1.msra.mxu0 0.0
      %1045 = vmatprep.mubr.f32.mxu0 0.0
      %1046 = vmatmul.mubr.f32.gmra.mrb[0].mxu0 %v972
      %v1047 = vpop.f32.mrb[0].mxu0
      %v1048 = vadd.f32 0.0, %v1047
      %v1049 = vpop.f32.mrb[0].mxu0
      %v1050 = vadd.f32 0.0, %v1049
      %1051 = vmatprep.mubr.f32.mxu0 0.0
      %1052 = vmatmul.mubr.f32.gmra.mrb[0].mxu0 %v975
      %v1053 = vpop.f32.mrb[0].mxu0
      %v1054 = vadd.f32 0.0, %v1053
      %v1055 = vpop.f32.mrb[0].mxu0
      %v1056 = vadd.f32 0.0, %v1055
      %1057 = vdwg.mxu0
      %v1058 = vadd.f32 %v955, %v1048
      %v1059 = vadd.f32 %v956, %v1050
      %v1060 = vadd.f32 %v957, %v1054
      %v1061 = vadd.f32 %v958, %v1056
      %1062 = vrot.lane.b32.xlu0 %v214, 94
      %v1063 = vpop.permute.xlu0 %1062
      %1064 = vrot.lane.b32.xlu0 %v210, 94
      %v1065 = vpop.permute.xlu0 %1064
      %1066 = vrot.lane.b32.xlu0 %v215, 94
      %v1067 = vpop.permute.xlu0 %1066
      %vm1068 = vcmask 769024
      %v1069 = vsel %vm1068, %v1063, %v1065
      %v1070 = vsel %vm1068, %v1065, %v1067
      %v1073 = vsel %vm418, %v1069, 0.0
      %v1074 = vsel %vm419, %v1070, 0.0
      %s1075 = scalar_lea.vmem %s1, 128
      %v1076 = vld [vmem:[%s1075] sm:$0xff]
      %v1077 = vld [vmem:[%s1075 + $0x8] sm:$0xff]
      %v1079 = vsel %vm238, %v1076, 0
      %v1082 = vsel %vm238, %v1077, 0
      %v1085 = vsel %vm245, %v1073, 0
      %v1088 = vsel %vm245, %v1074, 0
      %1090 = vmatprep.subr.mxu0 %v1088
      %1091 = vmatpush1.msra.mxu0 %v1085
      %1092 = vmatprep.subr.mxu0 0.0
      %1093 = vmatpush1.msra.mxu0 0.0
      %1094 = vmatprep.subr.mxu0 0.0
      %1095 = vmatpush1.msra.mxu0 0.0
      %1096 = vmatprep.subr.mxu0 0.0
      %1097 = vmatpush1.msra.mxu0 0.0
      %1098 = vmatprep.subr.mxu0 0.0
      %1099 = vmatpush1.msra.mxu0 0.0
      %1100 = vmatprep.subr.mxu0 0.0
      %1101 = vmatpush1.msra.mxu0 0.0
      %1102 = vmatprep.subr.mxu0 0.0
      %1103 = vmatpush1.msra.mxu0 0.0
      %1104 = vmatprep.subr.mxu0 0.0
      %1105 = vmatpush1.msra.mxu0 0.0
      %1106 = vmatprep.subr.mxu0 0.0
      %1107 = vmatpush1.msra.mxu0 0.0
      %1108 = vmatprep.subr.mxu0 0.0
      %1109 = vmatpush1.msra.mxu0 0.0
      %1110 = vmatprep.subr.mxu0 0.0
      %1111 = vmatpush1.msra.mxu0 0.0
      %1112 = vmatprep.subr.mxu0 0.0
      %1113 = vmatpush1.msra.mxu0 0.0
      %1114 = vmatprep.subr.mxu0 0.0
      %1115 = vmatpush1.msra.mxu0 0.0
      %1116 = vmatprep.subr.mxu0 0.0
      %1117 = vmatpush1.msra.mxu0 0.0
      %1118 = vmatprep.subr.mxu0 0.0
      %1119 = vmatpush1.msra.mxu0 0.0
      %1120 = vmatprep.subr.mxu0 0.0
      %1121 = vmatpush1.msra.mxu0 0.0
      %1122 = vmatprep.subr.mxu0 0.0
      %1123 = vmatpush1.msra.mxu0 0.0
      %1124 = vmatprep.subr.mxu0 0.0
      %1125 = vmatpush1.msra.mxu0 0.0
      %1126 = vmatprep.subr.mxu0 0.0
      %1127 = vmatpush1.msra.mxu0 0.0
      %1128 = vmatprep.subr.mxu0 0.0
      %1129 = vmatpush1.msra.mxu0 0.0
      %1130 = vmatprep.subr.mxu0 0.0
      %1131 = vmatpush1.msra.mxu0 0.0
      %1132 = vmatprep.subr.mxu0 0.0
      %1133 = vmatpush1.msra.mxu0 0.0
      %1134 = vmatprep.subr.mxu0 0.0
      %1135 = vmatpush1.msra.mxu0 0.0
      %1136 = vmatprep.subr.mxu0 0.0
      %1137 = vmatpush1.msra.mxu0 0.0
      %1138 = vmatprep.subr.mxu0 0.0
      %1139 = vmatpush1.msra.mxu0 0.0
      %1140 = vmatprep.subr.mxu0 0.0
      %1141 = vmatpush1.msra.mxu0 0.0
      %1142 = vmatprep.subr.mxu0 0.0
      %1143 = vmatpush1.msra.mxu0 0.0
      %1144 = vmatprep.subr.mxu0 0.0
      %1145 = vmatpush1.msra.mxu0 0.0
      %1146 = vmatprep.subr.mxu0 0.0
      %1147 = vmatpush1.msra.mxu0 0.0
      %1148 = vmatprep.subr.mxu0 0.0
      %1149 = vmatpush1.msra.mxu0 0.0
      %1150 = vmatprep.subr.mxu0 0.0
      %1151 = vmatpush1.msra.mxu0 0.0
      %1152 = vmatprep.subr.mxu0 0.0
      %1153 = vmatpush1.msra.mxu0 0.0
      %1154 = vmatprep.mubr.f32.mxu0 0.0
      %1155 = vmatmul.mubr.f32.gmra.mrb[0].mxu0 %v1079
      %v1156 = vpop.f32.mrb[0].mxu0
      %v1157 = vadd.f32 0.0, %v1156
      %v1158 = vpop.f32.mrb[0].mxu0
      %v1159 = vadd.f32 0.0, %v1158
      %1160 = vmatprep.mubr.f32.mxu0 0.0
      %1161 = vmatmul.mubr.f32.gmra.mrb[0].mxu0 %v1082
      %v1162 = vpop.f32.mrb[0].mxu0
      %v1163 = vadd.f32 0.0, %v1162
      %v1164 = vpop.f32.mrb[0].mxu0
      %v1165 = vadd.f32 0.0, %v1164
      %1166 = vdwg.mxu0
      %v1167 = vadd.f32 %v1058, %v1157
      %v1168 = vadd.f32 %v1059, %v1159
      %v1169 = vadd.f32 %v1060, %v1163
      %v1170 = vadd.f32 %v1061, %v1165
      %v1171 = vmax.f32 %v1167, 0.0
      %v1172 = vmax.f32 %v1168, 0.0
      %v1173 = vmax.f32 %v1169, 0.0
      %v1174 = vmax.f32 %v1170, 0.0
      %1179 = vrot.lane.b32.xlu0 %v1171, 17
      %v1180 = vpop.permute.xlu0 %1179
      %1181 = vrot.lane.b32.xlu0 %v1172, 17
      %v1182 = vpop.permute.xlu0 %1181
      %1183 = vrot.lane.b32.xlu0 %v1173, 17
      %v1184 = vpop.permute.xlu0 %1183
      %1185 = vrot.lane.b32.xlu0 %v1174, 17
      %v1186 = vpop.permute.xlu0 %1185
      %v1187 = vsel %vm209, %v1180, %v1182
      %v1188 = vsel %vm209, %v1184, %v1186
      %v1195 = vsel %vm209, 0.0, %v1180
      %v1196 = vsel %vm209, 0.0, %v1184
      %v1197 = vsel %vm209, %v1182, 0.0
      %v1198 = vsel %vm209, %v1186, 0.0
      %v1199 = vsel %vm218, %v1195, 0.0
      %v1200 = vsel %vm219, %v1187, 0.0
      %v1201 = vsel %vm218, %v1196, 0.0
      %v1202 = vsel %vm219, %v1188, 0.0
      %v1203 = vld [vmem:[%s2] sm:$0x7]
      %s1204 = scalar_lea.vmem %s2, 4
      %v1205 = vld [vmem:[%s1204] sm:$0x7]
      %1210 = vrot.lane.b32.xlu0 %v1195, 127
      %v1211 = vpop.permute.xlu0 %1210
      %1212 = vrot.lane.b32.xlu0 %v1187, 127
      %v1213 = vpop.permute.xlu0 %1212
      %1214 = vrot.lane.b32.xlu0 %v1197, 127
      %v1215 = vpop.permute.xlu0 %1214
      %1216 = vrot.lane.b32.xlu0 %v1196, 127
      %v1217 = vpop.permute.xlu0 %1216
      %1218 = vrot.lane.b32.xlu0 %v1188, 127
      %v1219 = vpop.permute.xlu0 %1218
      %1220 = vrot.lane.b32.xlu0 %v1198, 127
      %v1221 = vpop.permute.xlu0 %1220
      %v1222 = vsel %vm235, %v1211, %v1213
      %v1223 = vsel %vm235, %v1213, %v1215
      %v1224 = vsel %vm235, %v1217, %v1219
      %v1225 = vsel %vm235, %v1219, %v1221
      %vm1230 = vcmask 130048
      %v1232 = vsel %vm1230, %v1205, 0
      %1234 = vmatprep.subr.mxu0 %v1223
      %1235 = vmatpush1.msra.mxu0 %v1222
      %1236 = vmatprep.subr.mxu0 %v1225
      %1237 = vmatpush1.msra.mxu0 %v1224
      %1238 = vmatprep.subr.mxu0 0.0
      %1239 = vmatpush1.msra.mxu0 0.0
      %1240 = vmatprep.subr.mxu0 0.0
      %1241 = vmatpush1.msra.mxu0 0.0
      %1242 = vmatprep.subr.mxu0 0.0
      %1243 = vmatpush1.msra.mxu0 0.0
      %1244 = vmatprep.subr.mxu0 0.0
      %1245 = vmatpush1.msra.mxu0 0.0
      %1246 = vmatprep.subr.mxu0 0.0
      %1247 = vmatpush1.msra.mxu0 0.0
      %1248 = vmatprep.subr.mxu0 0.0
      %1249 = vmatpush1.msra.mxu0 0.0
      %1250 = vmatprep.subr.mxu0 0.0
      %1251 = vmatpush1.msra.mxu0 0.0
      %1252 = vmatprep.subr.mxu0 0.0
      %1253 = vmatpush1.msra.mxu0 0.0
      %1254 = vmatprep.subr.mxu0 0.0
      %1255 = vmatpush1.msra.mxu0 0.0
      %1256 = vmatprep.subr.mxu0 0.0
      %1257 = vmatpush1.msra.mxu0 0.0
      %1258 = vmatprep.subr.mxu0 0.0
      %1259 = vmatpush1.msra.mxu0 0.0
      %1260 = vmatprep.subr.mxu0 0.0
      %1261 = vmatpush1.msra.mxu0 0.0
      %1262 = vmatprep.subr.mxu0 0.0
      %1263 = vmatpush1.msra.mxu0 0.0
      %1264 = vmatprep.subr.mxu0 0.0
      %1265 = vmatpush1.msra.mxu0 0.0
      %1266 = vmatprep.subr.mxu0 0.0
      %1267 = vmatpush1.msra.mxu0 0.0
      %1268 = vmatprep.subr.mxu0 0.0
      %1269 = vmatpush1.msra.mxu0 0.0
      %1270 = vmatprep.subr.mxu0 0.0
      %1271 = vmatpush1.msra.mxu0 0.0
      %1272 = vmatprep.subr.mxu0 0.0
      %1273 = vmatpush1.msra.mxu0 0.0
      %1274 = vmatprep.subr.mxu0 0.0
      %1275 = vmatpush1.msra.mxu0 0.0
      %1276 = vmatprep.subr.mxu0 0.0
      %1277 = vmatpush1.msra.mxu0 0.0
      %1278 = vmatprep.subr.mxu0 0.0
      %1279 = vmatpush1.msra.mxu0 0.0
      %1280 = vmatprep.subr.mxu0 0.0
      %1281 = vmatpush1.msra.mxu0 0.0
      %1282 = vmatprep.subr.mxu0 0.0
      %1283 = vmatpush1.msra.mxu0 0.0
      %1284 = vmatprep.subr.mxu0 0.0
      %1285 = vmatpush1.msra.mxu0 0.0
      %1286 = vmatprep.subr.mxu0 0.0
      %1287 = vmatpush1.msra.mxu0 0.0
      %1288 = vmatprep.subr.mxu0 0.0
      %1289 = vmatpush1.msra.mxu0 0.0
      %1290 = vmatprep.subr.mxu0 0.0
      %1291 = vmatpush1.msra.mxu0 0.0
      %1292 = vmatprep.subr.mxu0 0.0
      %1293 = vmatpush1.msra.mxu0 0.0
      %1294 = vmatprep.subr.mxu0 0.0
      %1295 = vmatpush1.msra.mxu0 0.0
      %1296 = vmatprep.subr.mxu0 0.0
      %1297 = vmatpush1.msra.mxu0 0.0
      %1298 = vmatprep.mubr.f32.mxu0 0.0
      %1299 = vmatmul.mubr.f32.gmra.mrb[0].mxu0 %v1232
      %v1300 = vpop.f32.mrb[0].mxu0
      %v1301 = vadd.f32 0.0, %v1300
      %v1302 = vpop.f32.mrb[0].mxu0
      %v1303 = vadd.f32 0.0, %v1302
      %1304 = vdwg.mxu0
      %v1306 = vsel %vm1230, %v1203, 0
      %1308 = vmatprep.subr.mxu0 %v1200
      %1309 = vmatpush1.msra.mxu0 %v1199
      %1310 = vmatprep.subr.mxu0 %v1202
      %1311 = vmatpush1.msra.mxu0 %v1201
      %1312 = vmatprep.subr.mxu0 0.0
      %1313 = vmatpush1.msra.mxu0 0.0
      %1314 = vmatprep.subr.mxu0 0.0
      %1315 = vmatpush1.msra.mxu0 0.0
      %1316 = vmatprep.subr.mxu0 0.0
      %1317 = vmatpush1.msra.mxu0 0.0
      %1318 = vmatprep.subr.mxu0 0.0
      %1319 = vmatpush1.msra.mxu0 0.0
      %1320 = vmatprep.subr.mxu0 0.0
      %1321 = vmatpush1.msra.mxu0 0.0
      %1322 = vmatprep.subr.mxu0 0.0
      %1323 = vmatpush1.msra.mxu0 0.0
      %1324 = vmatprep.subr.mxu0 0.0
      %1325 = vmatpush1.msra.mxu0 0.0
      %1326 = vmatprep.subr.mxu0 0.0
      %1327 = vmatpush1.msra.mxu0 0.0
      %1328 = vmatprep.subr.mxu0 0.0
      %1329 = vmatpush1.msra.mxu0 0.0
      %1330 = vmatprep.subr.mxu0 0.0
      %1331 = vmatpush1.msra.mxu0 0.0
      %1332 = vmatprep.subr.mxu0 0.0
      %1333 = vmatpush1.msra.mxu0 0.0
      %1334 = vmatprep.subr.mxu0 0.0
      %1335 = vmatpush1.msra.mxu0 0.0
      %1336 = vmatprep.subr.mxu0 0.0
      %1337 = vmatpush1.msra.mxu0 0.0
      %1338 = vmatprep.subr.mxu0 0.0
      %1339 = vmatpush1.msra.mxu0 0.0
      %1340 = vmatprep.subr.mxu0 0.0
      %1341 = vmatpush1.msra.mxu0 0.0
      %1342 = vmatprep.subr.mxu0 0.0
      %1343 = vmatpush1.msra.mxu0 0.0
      %1344 = vmatprep.subr.mxu0 0.0
      %1345 = vmatpush1.msra.mxu0 0.0
      %1346 = vmatprep.subr.mxu0 0.0
      %1347 = vmatpush1.msra.mxu0 0.0
      %1348 = vmatprep.subr.mxu0 0.0
      %1349 = vmatpush1.msra.mxu0 0.0
      %1350 = vmatprep.subr.mxu0 0.0
      %1351 = vmatpush1.msra.mxu0 0.0
      %1352 = vmatprep.subr.mxu0 0.0
      %1353 = vmatpush1.msra.mxu0 0.0
      %1354 = vmatprep.subr.mxu0 0.0
      %1355 = vmatpush1.msra.mxu0 0.0
      %1356 = vmatprep.subr.mxu0 0.0
      %1357 = vmatpush1.msra.mxu0 0.0
      %1358 = vmatprep.subr.mxu0 0.0
      %1359 = vmatpush1.msra.mxu0 0.0
      %1360 = vmatprep.subr.mxu0 0.0
      %1361 = vmatpush1.msra.mxu0 0.0
      %1362 = vmatprep.subr.mxu0 0.0
      %1363 = vmatpush1.msra.mxu0 0.0
      %1364 = vmatprep.subr.mxu0 0.0
      %1365 = vmatpush1.msra.mxu0 0.0
      %1366 = vmatprep.subr.mxu0 0.0
      %1367 = vmatpush1.msra.mxu0 0.0
      %1368 = vmatprep.subr.mxu0 0.0
      %1369 = vmatpush1.msra.mxu0 0.0
      %1370 = vmatprep.subr.mxu0 0.0
      %1371 = vmatpush1.msra.mxu0 0.0
      %1372 = vmatprep.mubr.f32.mxu0 0.0
      %1373 = vmatmul.mubr.f32.gmra.mrb[0].mxu0 %v1306
      %v1374 = vpop.f32.mrb[0].mxu0
      %v1375 = vadd.f32 %v1301, %v1374
      %v1376 = vpop.f32.mrb[0].mxu0
      %v1377 = vadd.f32 %v1303, %v1376
      %1378 = vdwg.mxu0
      %1379 = vrot.lane.b32.xlu0 %v1195, 126
      %v1380 = vpop.permute.xlu0 %1379
      %1381 = vrot.lane.b32.xlu0 %v1187, 126
      %v1382 = vpop.permute.xlu0 %1381
      %1383 = vrot.lane.b32.xlu0 %v1197, 126
      %v1384 = vpop.permute.xlu0 %1383
      %1385 = vrot.lane.b32.xlu0 %v1196, 126
      %v1386 = vpop.permute.xlu0 %1385
      %1387 = vrot.lane.b32.xlu0 %v1188, 126
      %v1388 = vpop.permute.xlu0 %1387
      %1389 = vrot.lane.b32.xlu0 %v1198, 126
      %v1390 = vpop.permute.xlu0 %1389
      %v1391 = vsel %vm426, %v1380, %v1382
      %v1392 = vsel %vm426, %v1382, %v1384
      %v1393 = vsel %vm426, %v1386, %v1388
      %v1394 = vsel %vm426, %v1388, %v1390
      %v1399 = vsel %vm418, %v1391, 0.0
      %v1400 = vsel %vm419, %v1392, 0.0
      %v1401 = vsel %vm418, %v1393, 0.0
      %v1402 = vsel %vm419, %v1394, 0.0
      %s1403 = scalar_lea.vmem %s2, 8
      %v1404 = vld [vmem:[%s1403] sm:$0x7]
      %v1406 = vsel %vm1230, %v1404, 0
      %1408 = vmatprep.subr.mxu0 %v1400
      %1409 = vmatpush1.msra.mxu0 %v1399
      %1410 = vmatprep.subr.mxu0 %v1402
      %1411 = vmatpush1.msra.mxu0 %v1401
      %1412 = vmatprep.subr.mxu0 0.0
      %1413 = vmatpush1.msra.mxu0 0.0
      %1414 = vmatprep.subr.mxu0 0.0
      %1415 = vmatpush1.msra.mxu0 0.0
      %1416 = vmatprep.subr.mxu0 0.0
      %1417 = vmatpush1.msra.mxu0 0.0
      %1418 = vmatprep.subr.mxu0 0.0
      %1419 = vmatpush1.msra.mxu0 0.0
      %1420 = vmatprep.subr.mxu0 0.0
      %1421 = vmatpush1.msra.mxu0 0.0
      %1422 = vmatprep.subr.mxu0 0.0
      %1423 = vmatpush1.msra.mxu0 0.0
      %1424 = vmatprep.subr.mxu0 0.0
      %1425 = vmatpush1.msra.mxu0 0.0
      %1426 = vmatprep.subr.mxu0 0.0
      %1427 = vmatpush1.msra.mxu0 0.0
      %1428 = vmatprep.subr.mxu0 0.0
      %1429 = vmatpush1.msra.mxu0 0.0
      %1430 = vmatprep.subr.mxu0 0.0
      %1431 = vmatpush1.msra.mxu0 0.0
      %1432 = vmatprep.subr.mxu0 0.0
      %1433 = vmatpush1.msra.mxu0 0.0
      %1434 = vmatprep.subr.mxu0 0.0
      %1435 = vmatpush1.msra.mxu0 0.0
      %1436 = vmatprep.subr.mxu0 0.0
      %1437 = vmatpush1.msra.mxu0 0.0
      %1438 = vmatprep.subr.mxu0 0.0
      %1439 = vmatpush1.msra.mxu0 0.0
      %1440 = vmatprep.subr.mxu0 0.0
      %1441 = vmatpush1.msra.mxu0 0.0
      %1442 = vmatprep.subr.mxu0 0.0
      %1443 = vmatpush1.msra.mxu0 0.0
      %1444 = vmatprep.subr.mxu0 0.0
      %1445 = vmatpush1.msra.mxu0 0.0
      %1446 = vmatprep.subr.mxu0 0.0
      %1447 = vmatpush1.msra.mxu0 0.0
      %1448 = vmatprep.subr.mxu0 0.0
      %1449 = vmatpush1.msra.mxu0 0.0
      %1450 = vmatprep.subr.mxu0 0.0
      %1451 = vmatpush1.msra.mxu0 0.0
      %1452 = vmatprep.subr.mxu0 0.0
      %1453 = vmatpush1.msra.mxu0 0.0
      %1454 = vmatprep.subr.mxu0 0.0
      %1455 = vmatpush1.msra.mxu0 0.0
      %1456 = vmatprep.subr.mxu0 0.0
      %1457 = vmatpush1.msra.mxu0 0.0
      %1458 = vmatprep.subr.mxu0 0.0
      %1459 = vmatpush1.msra.mxu0 0.0
      %1460 = vmatprep.subr.mxu0 0.0
      %1461 = vmatpush1.msra.mxu0 0.0
      %1462 = vmatprep.subr.mxu0 0.0
      %1463 = vmatpush1.msra.mxu0 0.0
      %1464 = vmatprep.subr.mxu0 0.0
      %1465 = vmatpush1.msra.mxu0 0.0
      %1466 = vmatprep.subr.mxu0 0.0
      %1467 = vmatpush1.msra.mxu0 0.0
      %1468 = vmatprep.subr.mxu0 0.0
      %1469 = vmatpush1.msra.mxu0 0.0
      %1470 = vmatprep.subr.mxu0 0.0
      %1471 = vmatpush1.msra.mxu0 0.0
      %1472 = vmatprep.mubr.f32.mxu0 0.0
      %1473 = vmatmul.mubr.f32.gmra.mrb[0].mxu0 %v1406
      %v1474 = vpop.f32.mrb[0].mxu0
      %v1475 = vadd.f32 0.0, %v1474
      %v1476 = vpop.f32.mrb[0].mxu0
      %v1477 = vadd.f32 0.0, %v1476
      %1478 = vdwg.mxu0
      %v1479 = vadd.f32 %v1375, %v1475
      %v1480 = vadd.f32 %v1377, %v1477
      %1481 = vrot.lane.b32.xlu0 %v1195, 112
      %v1482 = vpop.permute.xlu0 %1481
      %1483 = vrot.lane.b32.xlu0 %v1187, 112
      %v1484 = vpop.permute.xlu0 %1483
      %1485 = vrot.lane.b32.xlu0 %v1197, 112
      %v1486 = vpop.permute.xlu0 %1485
      %1487 = vrot.lane.b32.xlu0 %v1196, 112
      %v1488 = vpop.permute.xlu0 %1487
      %1489 = vrot.lane.b32.xlu0 %v1188, 112
      %v1490 = vpop.permute.xlu0 %1489
      %1491 = vrot.lane.b32.xlu0 %v1198, 112
      %v1492 = vpop.permute.xlu0 %1491
      %v1493 = vsel %vm535, %v1482, %v1484
      %v1494 = vsel %vm535, %v1484, %v1486
      %v1495 = vsel %vm535, %v1488, %v1490
      %v1496 = vsel %vm535, %v1490, %v1492
      %v1501 = vsel %vm218, %v1493, 0.0
      %v1502 = vsel %vm219, %v1494, 0.0
      %v1503 = vsel %vm218, %v1495, 0.0
      %v1504 = vsel %vm219, %v1496, 0.0
      %s1505 = scalar_lea.vmem %s2, 12
      %v1506 = vld [vmem:[%s1505] sm:$0x7]
      %v1508 = vsel %vm1230, %v1506, 0
      %1510 = vmatprep.subr.mxu0 %v1502
      %1511 = vmatpush1.msra.mxu0 %v1501
      %1512 = vmatprep.subr.mxu0 %v1504
      %1513 = vmatpush1.msra.mxu0 %v1503
      %1514 = vmatprep.subr.mxu0 0.0
      %1515 = vmatpush1.msra.mxu0 0.0
      %1516 = vmatprep.subr.mxu0 0.0
      %1517 = vmatpush1.msra.mxu0 0.0
      %1518 = vmatprep.subr.mxu0 0.0
      %1519 = vmatpush1.msra.mxu0 0.0
      %1520 = vmatprep.subr.mxu0 0.0
      %1521 = vmatpush1.msra.mxu0 0.0
      %1522 = vmatprep.subr.mxu0 0.0
      %1523 = vmatpush1.msra.mxu0 0.0
      %1524 = vmatprep.subr.mxu0 0.0
      %1525 = vmatpush1.msra.mxu0 0.0
      %1526 = vmatprep.subr.mxu0 0.0
      %1527 = vmatpush1.msra.mxu0 0.0
      %1528 = vmatprep.subr.mxu0 0.0
      %1529 = vmatpush1.msra.mxu0 0.0
      %1530 = vmatprep.subr.mxu0 0.0
      %1531 = vmatpush1.msra.mxu0 0.0
      %1532 = vmatprep.subr.mxu0 0.0
      %1533 = vmatpush1.msra.mxu0 0.0
      %1534 = vmatprep.subr.mxu0 0.0
      %1535 = vmatpush1.msra.mxu0 0.0
      %1536 = vmatprep.subr.mxu0 0.0
      %1537 = vmatpush1.msra.mxu0 0.0
      %1538 = vmatprep.subr.mxu0 0.0
      %1539 = vmatpush1.msra.mxu0 0.0
      %1540 = vmatprep.subr.mxu0 0.0
      %1541 = vmatpush1.msra.mxu0 0.0
      %1542 = vmatprep.subr.mxu0 0.0
      %1543 = vmatpush1.msra.mxu0 0.0
      %1544 = vmatprep.subr.mxu0 0.0
      %1545 = vmatpush1.msra.mxu0 0.0
      %1546 = vmatprep.subr.mxu0 0.0
      %1547 = vmatpush1.msra.mxu0 0.0
      %1548 = vmatprep.subr.mxu0 0.0
      %1549 = vmatpush1.msra.mxu0 0.0
      %1550 = vmatprep.subr.mxu0 0.0
      %1551 = vmatpush1.msra.mxu0 0.0
      %1552 = vmatprep.subr.mxu0 0.0
      %1553 = vmatpush1.msra.mxu0 0.0
      %1554 = vmatprep.subr.mxu0 0.0
      %1555 = vmatpush1.msra.mxu0 0.0
      %1556 = vmatprep.subr.mxu0 0.0
      %1557 = vmatpush1.msra.mxu0 0.0
      %1558 = vmatprep.subr.mxu0 0.0
      %1559 = vmatpush1.msra.mxu0 0.0
      %1560 = vmatprep.subr.mxu0 0.0
      %1561 = vmatpush1.msra.mxu0 0.0
      %1562 = vmatprep.subr.mxu0 0.0
      %1563 = vmatpush1.msra.mxu0 0.0
      %1564 = vmatprep.subr.mxu0 0.0
      %1565 = vmatpush1.msra.mxu0 0.0
      %1566 = vmatprep.subr.mxu0 0.0
      %1567 = vmatpush1.msra.mxu0 0.0
      %1568 = vmatprep.subr.mxu0 0.0
      %1569 = vmatpush1.msra.mxu0 0.0
      %1570 = vmatprep.subr.mxu0 0.0
      %1571 = vmatpush1.msra.mxu0 0.0
      %1572 = vmatprep.subr.mxu0 0.0
      %1573 = vmatpush1.msra.mxu0 0.0
      %1574 = vmatprep.mubr.f32.mxu0 0.0
      %1575 = vmatmul.mubr.f32.gmra.mrb[0].mxu0 %v1508
      %v1576 = vpop.f32.mrb[0].mxu0
      %v1577 = vadd.f32 0.0, %v1576
      %v1578 = vpop.f32.mrb[0].mxu0
      %v1579 = vadd.f32 0.0, %v1578
      %1580 = vdwg.mxu0
      %v1581 = vadd.f32 %v1479, %v1577
      %v1582 = vadd.f32 %v1480, %v1579
      %s1583 = scalar_lea.vmem %s2, 16
      %v1584 = vld [vmem:[%s1583] sm:$0x7]
      %1585 = vrot.lane.b32.xlu0 %v1195, 111
      %v1586 = vpop.permute.xlu0 %1585
      %1587 = vrot.lane.b32.xlu0 %v1187, 111
      %v1588 = vpop.permute.xlu0 %1587
      %1589 = vrot.lane.b32.xlu0 %v1197, 111
      %v1590 = vpop.permute.xlu0 %1589
      %1591 = vrot.lane.b32.xlu0 %v1196, 111
      %v1592 = vpop.permute.xlu0 %1591
      %1593 = vrot.lane.b32.xlu0 %v1188, 111
      %v1594 = vpop.permute.xlu0 %1593
      %1595 = vrot.lane.b32.xlu0 %v1198, 111
      %v1596 = vpop.permute.xlu0 %1595
      %v1597 = vsel %vm647, %v1586, %v1588
      %v1598 = vsel %vm647, %v1588, %v1590
      %v1599 = vsel %vm647, %v1592, %v1594
      %v1600 = vsel %vm647, %v1594, %v1596
      %v1606 = vsel %vm1230, %v1584, 0
      %1608 = vmatprep.subr.mxu0 %v1598
      %1609 = vmatpush1.msra.mxu0 %v1597
      %1610 = vmatprep.subr.mxu0 %v1600
      %1611 = vmatpush1.msra.mxu0 %v1599
      %1612 = vmatprep.subr.mxu0 0.0
      %1613 = vmatpush1.msra.mxu0 0.0
      %1614 = vmatprep.subr.mxu0 0.0
      %1615 = vmatpush1.msra.mxu0 0.0
      %1616 = vmatprep.subr.mxu0 0.0
      %1617 = vmatpush1.msra.mxu0 0.0
      %1618 = vmatprep.subr.mxu0 0.0
      %1619 = vmatpush1.msra.mxu0 0.0
      %1620 = vmatprep.subr.mxu0 0.0
      %1621 = vmatpush1.msra.mxu0 0.0
      %1622 = vmatprep.subr.mxu0 0.0
      %1623 = vmatpush1.msra.mxu0 0.0
      %1624 = vmatprep.subr.mxu0 0.0
      %1625 = vmatpush1.msra.mxu0 0.0
      %1626 = vmatprep.subr.mxu0 0.0
      %1627 = vmatpush1.msra.mxu0 0.0
      %1628 = vmatprep.subr.mxu0 0.0
      %1629 = vmatpush1.msra.mxu0 0.0
      %1630 = vmatprep.subr.mxu0 0.0
      %1631 = vmatpush1.msra.mxu0 0.0
      %1632 = vmatprep.subr.mxu0 0.0
      %1633 = vmatpush1.msra.mxu0 0.0
      %1634 = vmatprep.subr.mxu0 0.0
      %1635 = vmatpush1.msra.mxu0 0.0
      %1636 = vmatprep.subr.mxu0 0.0
      %1637 = vmatpush1.msra.mxu0 0.0
      %1638 = vmatprep.subr.mxu0 0.0
      %1639 = vmatpush1.msra.mxu0 0.0
      %1640 = vmatprep.subr.mxu0 0.0
      %1641 = vmatpush1.msra.mxu0 0.0
      %1642 = vmatprep.subr.mxu0 0.0
      %1643 = vmatpush1.msra.mxu0 0.0
      %1644 = vmatprep.subr.mxu0 0.0
      %1645 = vmatpush1.msra.mxu0 0.0
      %1646 = vmatprep.subr.mxu0 0.0
      %1647 = vmatpush1.msra.mxu0 0.0
      %1648 = vmatprep.subr.mxu0 0.0
      %1649 = vmatpush1.msra.mxu0 0.0
      %1650 = vmatprep.subr.mxu0 0.0
      %1651 = vmatpush1.msra.mxu0 0.0
      %1652 = vmatprep.subr.mxu0 0.0
      %1653 = vmatpush1.msra.mxu0 0.0
      %1654 = vmatprep.subr.mxu0 0.0
      %1655 = vmatpush1.msra.mxu0 0.0
      %1656 = vmatprep.subr.mxu0 0.0
      %1657 = vmatpush1.msra.mxu0 0.0
      %1658 = vmatprep.subr.mxu0 0.0
      %1659 = vmatpush1.msra.mxu0 0.0
      %1660 = vmatprep.subr.mxu0 0.0
      %1661 = vmatpush1.msra.mxu0 0.0
      %1662 = vmatprep.subr.mxu0 0.0
      %1663 = vmatpush1.msra.mxu0 0.0
      %1664 = vmatprep.subr.mxu0 0.0
      %1665 = vmatpush1.msra.mxu0 0.0
      %1666 = vmatprep.subr.mxu0 0.0
      %1667 = vmatpush1.msra.mxu0 0.0
      %1668 = vmatprep.subr.mxu0 0.0
      %1669 = vmatpush1.msra.mxu0 0.0
      %1670 = vmatprep.subr.mxu0 0.0
      %1671 = vmatpush1.msra.mxu0 0.0
      %1672 = vmatprep.mubr.f32.mxu0 0.0
      %1673 = vmatmul.mubr.f32.gmra.mrb[0].mxu0 %v1606
      %v1674 = vpop.f32.mrb[0].mxu0
      %v1675 = vadd.f32 0.0, %v1674
      %v1676 = vpop.f32.mrb[0].mxu0
      %v1677 = vadd.f32 0.0, %v1676
      %1678 = vdwg.mxu0
      %v1679 = vadd.f32 %v1581, %v1675
      %v1680 = vadd.f32 %v1582, %v1677
      %1681 = vrot.lane.b32.xlu0 %v1195, 110
      %v1682 = vpop.permute.xlu0 %1681
      %1683 = vrot.lane.b32.xlu0 %v1187, 110
      %v1684 = vpop.permute.xlu0 %1683
      %1685 = vrot.lane.b32.xlu0 %v1197, 110
      %v1686 = vpop.permute.xlu0 %1685
      %1687 = vrot.lane.b32.xlu0 %v1196, 110
      %v1688 = vpop.permute.xlu0 %1687
      %1689 = vrot.lane.b32.xlu0 %v1188, 110
      %v1690 = vpop.permute.xlu0 %1689
      %1691 = vrot.lane.b32.xlu0 %v1198, 110
      %v1692 = vpop.permute.xlu0 %1691
      %v1693 = vsel %vm747, %v1682, %v1684
      %v1694 = vsel %vm747, %v1684, %v1686
      %v1695 = vsel %vm747, %v1688, %v1690
      %v1696 = vsel %vm747, %v1690, %v1692
      %v1701 = vsel %vm418, %v1693, 0.0
      %v1702 = vsel %vm419, %v1694, 0.0
      %v1703 = vsel %vm418, %v1695, 0.0
      %v1704 = vsel %vm419, %v1696, 0.0
      %s1705 = scalar_lea.vmem %s2, 20
      %v1706 = vld [vmem:[%s1705] sm:$0x7]
      %v1708 = vsel %vm1230, %v1706, 0
      %1710 = vmatprep.subr.mxu0 %v1702
      %1711 = vmatpush1.msra.mxu0 %v1701
      %1712 = vmatprep.subr.mxu0 %v1704
      %1713 = vmatpush1.msra.mxu0 %v1703
      %1714 = vmatprep.subr.mxu0 0.0
      %1715 = vmatpush1.msra.mxu0 0.0
      %1716 = vmatprep.subr.mxu0 0.0
      %1717 = vmatpush1.msra.mxu0 0.0
      %1718 = vmatprep.subr.mxu0 0.0
      %1719 = vmatpush1.msra.mxu0 0.0
      %1720 = vmatprep.subr.mxu0 0.0
      %1721 = vmatpush1.msra.mxu0 0.0
      %1722 = vmatprep.subr.mxu0 0.0
      %1723 = vmatpush1.msra.mxu0 0.0
      %1724 = vmatprep.subr.mxu0 0.0
      %1725 = vmatpush1.msra.mxu0 0.0
      %1726 = vmatprep.subr.mxu0 0.0
      %1727 = vmatpush1.msra.mxu0 0.0
      %1728 = vmatprep.subr.mxu0 0.0
      %1729 = vmatpush1.msra.mxu0 0.0
      %1730 = vmatprep.subr.mxu0 0.0
      %1731 = vmatpush1.msra.mxu0 0.0
      %1732 = vmatprep.subr.mxu0 0.0
      %1733 = vmatpush1.msra.mxu0 0.0
      %1734 = vmatprep.subr.mxu0 0.0
      %1735 = vmatpush1.msra.mxu0 0.0
      %1736 = vmatprep.subr.mxu0 0.0
      %1737 = vmatpush1.msra.mxu0 0.0
      %1738 = vmatprep.subr.mxu0 0.0
      %1739 = vmatpush1.msra.mxu0 0.0
      %1740 = vmatprep.subr.mxu0 0.0
      %1741 = vmatpush1.msra.mxu0 0.0
      %1742 = vmatprep.subr.mxu0 0.0
      %1743 = vmatpush1.msra.mxu0 0.0
      %1744 = vmatprep.subr.mxu0 0.0
      %1745 = vmatpush1.msra.mxu0 0.0
      %1746 = vmatprep.subr.mxu0 0.0
      %1747 = vmatpush1.msra.mxu0 0.0
      %1748 = vmatprep.subr.mxu0 0.0
      %1749 = vmatpush1.msra.mxu0 0.0
      %1750 = vmatprep.subr.mxu0 0.0
      %1751 = vmatpush1.msra.mxu0 0.0
      %1752 = vmatprep.subr.mxu0 0.0
      %1753 = vmatpush1.msra.mxu0 0.0
      %1754 = vmatprep.subr.mxu0 0.0
      %1755 = vmatpush1.msra.mxu0 0.0
      %1756 = vmatprep.subr.mxu0 0.0
      %1757 = vmatpush1.msra.mxu0 0.0
      %1758 = vmatprep.subr.mxu0 0.0
      %1759 = vmatpush1.msra.mxu0 0.0
      %1760 = vmatprep.subr.mxu0 0.0
      %1761 = vmatpush1.msra.mxu0 0.0
      %1762 = vmatprep.subr.mxu0 0.0
      %1763 = vmatpush1.msra.mxu0 0.0
      %1764 = vmatprep.subr.mxu0 0.0
      %1765 = vmatpush1.msra.mxu0 0.0
      %1766 = vmatprep.subr.mxu0 0.0
      %1767 = vmatpush1.msra.mxu0 0.0
      %1768 = vmatprep.subr.mxu0 0.0
      %1769 = vmatpush1.msra.mxu0 0.0
      %1770 = vmatprep.subr.mxu0 0.0
      %1771 = vmatpush1.msra.mxu0 0.0
      %1772 = vmatprep.subr.mxu0 0.0
      %1773 = vmatpush1.msra.mxu0 0.0
      %1774 = vmatprep.mubr.f32.mxu0 0.0
      %1775 = vmatmul.mubr.f32.gmra.mrb[0].mxu0 %v1708
      %v1776 = vpop.f32.mrb[0].mxu0
      %v1777 = vadd.f32 0.0, %v1776
      %v1778 = vpop.f32.mrb[0].mxu0
      %v1779 = vadd.f32 0.0, %v1778
      %1780 = vdwg.mxu0
      %v1781 = vadd.f32 %v1679, %v1777
      %v1782 = vadd.f32 %v1680, %v1779
      %1783 = vrot.lane.b32.xlu0 %v1195, 96
      %v1784 = vpop.permute.xlu0 %1783
      %1785 = vrot.lane.b32.xlu0 %v1187, 96
      %v1786 = vpop.permute.xlu0 %1785
      %1787 = vrot.lane.b32.xlu0 %v1197, 96
      %v1788 = vpop.permute.xlu0 %1787
      %1789 = vrot.lane.b32.xlu0 %v1196, 96
      %v1790 = vpop.permute.xlu0 %1789
      %1791 = vrot.lane.b32.xlu0 %v1188, 96
      %v1792 = vpop.permute.xlu0 %1791
      %1793 = vrot.lane.b32.xlu0 %v1198, 96
      %v1794 = vpop.permute.xlu0 %1793
      %v1795 = vsel %vm856, %v1784, %v1786
      %v1796 = vsel %vm856, %v1786, %v1788
      %v1797 = vsel %vm856, %v1790, %v1792
      %v1798 = vsel %vm856, %v1792, %v1794
      %v1803 = vsel %vm218, %v1795, 0.0
      %v1804 = vsel %vm219, %v1796, 0.0
      %v1805 = vsel %vm218, %v1797, 0.0
      %v1806 = vsel %vm219, %v1798, 0.0
      %s1807 = scalar_lea.vmem %s2, 24
      %v1808 = vld [vmem:[%s1807] sm:$0x7]
      %v1810 = vsel %vm1230, %v1808, 0
      %1812 = vmatprep.subr.mxu0 %v1804
      %1813 = vmatpush1.msra.mxu0 %v1803
      %1814 = vmatprep.subr.mxu0 %v1806
      %1815 = vmatpush1.msra.mxu0 %v1805
      %1816 = vmatprep.subr.mxu0 0.0
      %1817 = vmatpush1.msra.mxu0 0.0
      %1818 = vmatprep.subr.mxu0 0.0
      %1819 = vmatpush1.msra.mxu0 0.0
      %1820 = vmatprep.subr.mxu0 0.0
      %1821 = vmatpush1.msra.mxu0 0.0
      %1822 = vmatprep.subr.mxu0 0.0
      %1823 = vmatpush1.msra.mxu0 0.0
      %1824 = vmatprep.subr.mxu0 0.0
      %1825 = vmatpush1.msra.mxu0 0.0
      %1826 = vmatprep.subr.mxu0 0.0
      %1827 = vmatpush1.msra.mxu0 0.0
      %1828 = vmatprep.subr.mxu0 0.0
      %1829 = vmatpush1.msra.mxu0 0.0
      %1830 = vmatprep.subr.mxu0 0.0
      %1831 = vmatpush1.msra.mxu0 0.0
      %1832 = vmatprep.subr.mxu0 0.0
      %1833 = vmatpush1.msra.mxu0 0.0
      %1834 = vmatprep.subr.mxu0 0.0
      %1835 = vmatpush1.msra.mxu0 0.0
      %1836 = vmatprep.subr.mxu0 0.0
      %1837 = vmatpush1.msra.mxu0 0.0
      %1838 = vmatprep.subr.mxu0 0.0
      %1839 = vmatpush1.msra.mxu0 0.0
      %1840 = vmatprep.subr.mxu0 0.0
      %1841 = vmatpush1.msra.mxu0 0.0
      %1842 = vmatprep.subr.mxu0 0.0
      %1843 = vmatpush1.msra.mxu0 0.0
      %1844 = vmatprep.subr.mxu0 0.0
      %1845 = vmatpush1.msra.mxu0 0.0
      %1846 = vmatprep.subr.mxu0 0.0
      %1847 = vmatpush1.msra.mxu0 0.0
      %1848 = vmatprep.subr.mxu0 0.0
      %1849 = vmatpush1.msra.mxu0 0.0
      %1850 = vmatprep.subr.mxu0 0.0
      %1851 = vmatpush1.msra.mxu0 0.0
      %1852 = vmatprep.subr.mxu0 0.0
      %1853 = vmatpush1.msra.mxu0 0.0
      %1854 = vmatprep.subr.mxu0 0.0
      %1855 = vmatpush1.msra.mxu0 0.0
      %1856 = vmatprep.subr.mxu0 0.0
      %1857 = vmatpush1.msra.mxu0 0.0
      %1858 = vmatprep.subr.mxu0 0.0
      %1859 = vmatpush1.msra.mxu0 0.0
      %1860 = vmatprep.subr.mxu0 0.0
      %1861 = vmatpush1.msra.mxu0 0.0
      %1862 = vmatprep.subr.mxu0 0.0
      %1863 = vmatpush1.msra.mxu0 0.0
      %1864 = vmatprep.subr.mxu0 0.0
      %1865 = vmatpush1.msra.mxu0 0.0
      %1866 = vmatprep.subr.mxu0 0.0
      %1867 = vmatpush1.msra.mxu0 0.0
      %1868 = vmatprep.subr.mxu0 0.0
      %1869 = vmatpush1.msra.mxu0 0.0
      %1870 = vmatprep.subr.mxu0 0.0
      %1871 = vmatpush1.msra.mxu0 0.0
      %1872 = vmatprep.subr.mxu0 0.0
      %1873 = vmatpush1.msra.mxu0 0.0
      %1874 = vmatprep.subr.mxu0 0.0
      %1875 = vmatpush1.msra.mxu0 0.0
      %1876 = vmatprep.mubr.f32.mxu0 0.0
      %1877 = vmatmul.mubr.f32.gmra.mrb[0].mxu0 %v1810
      %v1878 = vpop.f32.mrb[0].mxu0
      %v1879 = vadd.f32 0.0, %v1878
      %v1880 = vpop.f32.mrb[0].mxu0
      %v1881 = vadd.f32 0.0, %v1880
      %1882 = vdwg.mxu0
      %v1883 = vadd.f32 %v1781, %v1879
      %v1884 = vadd.f32 %v1782, %v1881
      %s1885 = scalar_lea.vmem %s2, 28
      %v1886 = vld [vmem:[%s1885] sm:$0x7]
      %1887 = vrot.lane.b32.xlu0 %v1195, 95
      %v1888 = vpop.permute.xlu0 %1887
      %1889 = vrot.lane.b32.xlu0 %v1187, 95
      %v1890 = vpop.permute.xlu0 %1889
      %1891 = vrot.lane.b32.xlu0 %v1197, 95
      %v1892 = vpop.permute.xlu0 %1891
      %1893 = vrot.lane.b32.xlu0 %v1196, 95
      %v1894 = vpop.permute.xlu0 %1893
      %1895 = vrot.lane.b32.xlu0 %v1188, 95
      %v1896 = vpop.permute.xlu0 %1895
      %1897 = vrot.lane.b32.xlu0 %v1198, 95
      %v1898 = vpop.permute.xlu0 %1897
      %v1899 = vsel %vm968, %v1888, %v1890
      %v1900 = vsel %vm968, %v1890, %v1892
      %v1901 = vsel %vm968, %v1894, %v1896
      %v1902 = vsel %vm968, %v1896, %v1898
      %v1908 = vsel %vm1230, %v1886, 0
      %1910 = vmatprep.subr.mxu0 %v1900
      %1911 = vmatpush1.msra.mxu0 %v1899
      %1912 = vmatprep.subr.mxu0 %v1902
      %1913 = vmatpush1.msra.mxu0 %v1901
      %1914 = vmatprep.subr.mxu0 0.0
      %1915 = vmatpush1.msra.mxu0 0.0
      %1916 = vmatprep.subr.mxu0 0.0
      %1917 = vmatpush1.msra.mxu0 0.0
      %1918 = vmatprep.subr.mxu0 0.0
      %1919 = vmatpush1.msra.mxu0 0.0
      %1920 = vmatprep.subr.mxu0 0.0
      %1921 = vmatpush1.msra.mxu0 0.0
      %1922 = vmatprep.subr.mxu0 0.0
      %1923 = vmatpush1.msra.mxu0 0.0
      %1924 = vmatprep.subr.mxu0 0.0
      %1925 = vmatpush1.msra.mxu0 0.0
      %1926 = vmatprep.subr.mxu0 0.0
      %1927 = vmatpush1.msra.mxu0 0.0
      %1928 = vmatprep.subr.mxu0 0.0
      %1929 = vmatpush1.msra.mxu0 0.0
      %1930 = vmatprep.subr.mxu0 0.0
      %1931 = vmatpush1.msra.mxu0 0.0
      %1932 = vmatprep.subr.mxu0 0.0
      %1933 = vmatpush1.msra.mxu0 0.0
      %1934 = vmatprep.subr.mxu0 0.0
      %1935 = vmatpush1.msra.mxu0 0.0
      %1936 = vmatprep.subr.mxu0 0.0
      %1937 = vmatpush1.msra.mxu0 0.0
      %1938 = vmatprep.subr.mxu0 0.0
      %1939 = vmatpush1.msra.mxu0 0.0
      %1940 = vmatprep.subr.mxu0 0.0
      %1941 = vmatpush1.msra.mxu0 0.0
      %1942 = vmatprep.subr.mxu0 0.0
      %1943 = vmatpush1.msra.mxu0 0.0
      %1944 = vmatprep.subr.mxu0 0.0
      %1945 = vmatpush1.msra.mxu0 0.0
      %1946 = vmatprep.subr.mxu0 0.0
      %1947 = vmatpush1.msra.mxu0 0.0
      %1948 = vmatprep.subr.mxu0 0.0
      %1949 = vmatpush1.msra.mxu0 0.0
      %1950 = vmatprep.subr.mxu0 0.0
      %1951 = vmatpush1.msra.mxu0 0.0
      %1952 = vmatprep.subr.mxu0 0.0
      %1953 = vmatpush1.msra.mxu0 0.0
      %1954 = vmatprep.subr.mxu0 0.0
      %1955 = vmatpush1.msra.mxu0 0.0
      %1956 = vmatprep.subr.mxu0 0.0
      %1957 = vmatpush1.msra.mxu0 0.0
      %1958 = vmatprep.subr.mxu0 0.0
      %1959 = vmatpush1.msra.mxu0 0.0
      %1960 = vmatprep.subr.mxu0 0.0
      %1961 = vmatpush1.msra.mxu0 0.0
      %1962 = vmatprep.subr.mxu0 0.0
      %1963 = vmatpush1.msra.mxu0 0.0
      %1964 = vmatprep.subr.mxu0 0.0
      %1965 = vmatpush1.msra.mxu0 0.0
      %1966 = vmatprep.subr.mxu0 0.0
      %1967 = vmatpush1.msra.mxu0 0.0
      %1968 = vmatprep.subr.mxu0 0.0
      %1969 = vmatpush1.msra.mxu0 0.0
      %1970 = vmatprep.subr.mxu0 0.0
      %1971 = vmatpush1.msra.mxu0 0.0
      %1972 = vmatprep.subr.mxu0 0.0
      %1973 = vmatpush1.msra.mxu0 0.0
      %1974 = vmatprep.mubr.f32.mxu0 0.0
      %1975 = vmatmul.mubr.f32.gmra.mrb[0].mxu0 %v1908
      %v1976 = vpop.f32.mrb[0].mxu0
      %v1977 = vadd.f32 0.0, %v1976
      %v1978 = vpop.f32.mrb[0].mxu0
      %v1979 = vadd.f32 0.0, %v1978
      %1980 = vdwg.mxu0
      %v1981 = vadd.f32 %v1883, %v1977
      %v1982 = vadd.f32 %v1884, %v1979
      %1983 = vrot.lane.b32.xlu0 %v1195, 94
      %v1984 = vpop.permute.xlu0 %1983
      %1985 = vrot.lane.b32.xlu0 %v1187, 94
      %v1986 = vpop.permute.xlu0 %1985
      %1987 = vrot.lane.b32.xlu0 %v1197, 94
      %v1988 = vpop.permute.xlu0 %1987
      %1989 = vrot.lane.b32.xlu0 %v1196, 94
      %v1990 = vpop.permute.xlu0 %1989
      %1991 = vrot.lane.b32.xlu0 %v1188, 94
      %v1992 = vpop.permute.xlu0 %1991
      %1993 = vrot.lane.b32.xlu0 %v1198, 94
      %v1994 = vpop.permute.xlu0 %1993
      %v1995 = vsel %vm1068, %v1984, %v1986
      %v1996 = vsel %vm1068, %v1986, %v1988
      %v1997 = vsel %vm1068, %v1990, %v1992
      %v1998 = vsel %vm1068, %v1992, %v1994
      %v2003 = vsel %vm418, %v1995, 0.0
      %v2004 = vsel %vm419, %v1996, 0.0
      %v2005 = vsel %vm418, %v1997, 0.0
      %v2006 = vsel %vm419, %v1998, 0.0
      %s2007 = scalar_lea.vmem %s2, 32
      %v2008 = vld [vmem:[%s2007] sm:$0x7]
      %v2010 = vsel %vm1230, %v2008, 0
      %2012 = vmatprep.subr.mxu0 %v2004
      %2013 = vmatpush1.msra.mxu0 %v2003
      %2014 = vmatprep.subr.mxu0 %v2006
      %2015 = vmatpush1.msra.mxu0 %v2005
      %2016 = vmatprep.subr.mxu0 0.0
      %2017 = vmatpush1.msra.mxu0 0.0
      %2018 = vmatprep.subr.mxu0 0.0
      %2019 = vmatpush1.msra.mxu0 0.0
      %2020 = vmatprep.subr.mxu0 0.0
      %2021 = vmatpush1.msra.mxu0 0.0
      %2022 = vmatprep.subr.mxu0 0.0
      %2023 = vmatpush1.msra.mxu0 0.0
      %2024 = vmatprep.subr.mxu0 0.0
      %2025 = vmatpush1.msra.mxu0 0.0
      %2026 = vmatprep.subr.mxu0 0.0
      %2027 = vmatpush1.msra.mxu0 0.0
      %2028 = vmatprep.subr.mxu0 0.0
      %2029 = vmatpush1.msra.mxu0 0.0
      %2030 = vmatprep.subr.mxu0 0.0
      %2031 = vmatpush1.msra.mxu0 0.0
      %2032 = vmatprep.subr.mxu0 0.0
      %2033 = vmatpush1.msra.mxu0 0.0
      %2034 = vmatprep.subr.mxu0 0.0
      %2035 = vmatpush1.msra.mxu0 0.0
      %2036 = vmatprep.subr.mxu0 0.0
      %2037 = vmatpush1.msra.mxu0 0.0
      %2038 = vmatprep.subr.mxu0 0.0
      %2039 = vmatpush1.msra.mxu0 0.0
      %2040 = vmatprep.subr.mxu0 0.0
      %2041 = vmatpush1.msra.mxu0 0.0
      %2042 = vmatprep.subr.mxu0 0.0
      %2043 = vmatpush1.msra.mxu0 0.0
      %2044 = vmatprep.subr.mxu0 0.0
      %2045 = vmatpush1.msra.mxu0 0.0
      %2046 = vmatprep.subr.mxu0 0.0
      %2047 = vmatpush1.msra.mxu0 0.0
      %2048 = vmatprep.subr.mxu0 0.0
      %2049 = vmatpush1.msra.mxu0 0.0
      %2050 = vmatprep.subr.mxu0 0.0
      %2051 = vmatpush1.msra.mxu0 0.0
      %2052 = vmatprep.subr.mxu0 0.0
      %2053 = vmatpush1.msra.mxu0 0.0
      %2054 = vmatprep.subr.mxu0 0.0
      %2055 = vmatpush1.msra.mxu0 0.0
      %2056 = vmatprep.subr.mxu0 0.0
      %2057 = vmatpush1.msra.mxu0 0.0
      %2058 = vmatprep.subr.mxu0 0.0
      %2059 = vmatpush1.msra.mxu0 0.0
      %2060 = vmatprep.subr.mxu0 0.0
      %2061 = vmatpush1.msra.mxu0 0.0
      %2062 = vmatprep.subr.mxu0 0.0
      %2063 = vmatpush1.msra.mxu0 0.0
      %2064 = vmatprep.subr.mxu0 0.0
      %2065 = vmatpush1.msra.mxu0 0.0
      %2066 = vmatprep.subr.mxu0 0.0
      %2067 = vmatpush1.msra.mxu0 0.0
      %2068 = vmatprep.subr.mxu0 0.0
      %2069 = vmatpush1.msra.mxu0 0.0
      %2070 = vmatprep.subr.mxu0 0.0
      %2071 = vmatpush1.msra.mxu0 0.0
      %2072 = vmatprep.subr.mxu0 0.0
      %2073 = vmatpush1.msra.mxu0 0.0
      %2074 = vmatprep.subr.mxu0 0.0
      %2075 = vmatpush1.msra.mxu0 0.0
      %2076 = vmatprep.mubr.f32.mxu0 0.0
      %2077 = vmatmul.mubr.f32.gmra.mrb[0].mxu0 %v2010
      %v2078 = vpop.f32.mrb[0].mxu0
      %v2079 = vadd.f32 0.0, %v2078
      %v2080 = vpop.f32.mrb[0].mxu0
      %v2081 = vadd.f32 0.0, %v2080
      %2082 = vdwg.mxu0
      %v2083 = vadd.f32 %v1981, %v2079
      %v2084 = vadd.f32 %v1982, %v2081
      %v2087 = vcombine.low %v2083, %v2084
      %2089 = vst [vmem:[%s170] sm:$0x77] %v2087
      %p2090 = scmp.lt.s32.totalorder %s14, 1
      %s2091 = scalar_select %p2090, %s14, 1
      %s2092 = smul.addr %s2091, 2
      %s2093 = smul.addr %s2092, 4
      %s2094 = scalar_lea.vmem %s3, %s2093
      // Predicated region
      $region33: #{tpu_custom_call.1} parent=31 // pred_check
        %p2095 = pneg %p100
      $region34: #{tpu_custom_call.1} parent=31 // pred_check_branch
        %2097 = sbr.rel (%p2095) target = $region36
      $region35: #{tpu_custom_call.1} parent=31 // pred_region
        _
      $region36: #{tpu_custom_call.1} parent=31 // pred_fallthru
        _
    $region32: #{tpu_custom_call.1} parent=5 // pred_fallthru
      _
    %p2098 = scmp.le.s32.totalorder 2, %s9
    // Predicated region
    $region37: #{tpu_custom_call.1} parent=5 // pred_check
      %p2099 = pneg %p2098
    $region38: #{tpu_custom_call.1} parent=5 // pred_check_branch
      %2101 = sbr.rel (%p2099) target = $region40
    $region39: #{tpu_custom_call.1} parent=5 // pred_region
      %s2102 = ssub.s32 %s9, 2
      // Predicated region
      $region41: #{tpu_custom_call.1} parent=39 // pred_check
        %p2103 = pneg %p106
      $region42: #{tpu_custom_call.1} parent=39 // pred_check_branch
        %2105 = sbr.rel (%p2103) target = $region44
      $region43: #{tpu_custom_call.1} parent=39 // pred_region
        %p2106 = scmp.lt.s32.totalorder %s15, 1
        %s2107 = scalar_select %p2106, %s15, 1
        %s2108 = smul.addr %s2107, 2
        %s2109 = smul.addr %s2108, 4
        %s2110 = scalar_lea.vmem %s3, %s2109
      $region44: #{tpu_custom_call.1} parent=39 // pred_fallthru
        _
    $region40: #{tpu_custom_call.1} parent=5 // pred_fallthru
      _
  $region6: #{tpu_custom_call.1} parent=0 // loop_footer
    %s13 = sadd.s32 1, %s9
  $region7: #{tpu_custom_call.1} parent=0 // loop_footer_branch
    %8 = sbr.rel target = $region3
  $region8: #{tpu_custom_call.1} parent=0 // loop_exit
    _

</llo_original>
